<compile_context>
chip_gen: v7x
topology: tpu7x:2x2x1
jax: 0.10.0
libtpu: 0.0.40
codegen_flags: <defaults>
</compile_context>

<pallas_src>
import functools

import jax
import jax.numpy as jnp
from jax import lax
from jax.experimental import pallas as pl
from jax.experimental.pallas import tpu as pltpu
import numpy as np

LEAKY_SLOPE = 0.01   # torch.nn.LeakyReLU default
LN_EPS = 1e-5        # torch.nn.LayerNorm default


def _kernel(g_ref, x_ref, w1_ref, b1_ref, w2_ref, b2_ref,
            gamma_ref, beta_ref, out_ref, *, terms, GS, P, B_blk):
    N = g_ref.shape[-1]
    C = x_ref.shape[-1]

    # ---- fused two-layer MLP for ALL (batch, term, g) heads at once ----
    # Fold the B_blk batches into the row dimension -> lane-dense matmuls.
    x_flat = x_ref[...].reshape(B_blk * N, C)                      # [B_blk*N, C]
    h = jnp.dot(x_flat, w1_ref[...], preferred_element_type=jnp.float32)
    h = jnp.maximum(h + b1_ref[...], 0.0)                          # relu
    # Block-diagonal second layer: off-diagonal blocks are zero, so this is
    # exactly the per-(t, g) P x P Linear for every head.
    y_all = jnp.dot(h, w2_ref[...], preferred_element_type=jnp.float32)
    y_all = y_all + b2_ref[...]                                    # [B_blk*N, F]

    # Identity mask (hoisted out of all loops; only needed for diag terms).
    need_eye = any(d for _, d in terms)
    if need_eye:
        eye = (lax.broadcasted_iota(jnp.int32, (N, N), 0) ==
               lax.broadcasted_iota(jnp.int32, (N, N), 1)).astype(jnp.float32)

    out_cols = []
    for b in range(B_blk):
        y_b = y_all[b * N:(b + 1) * N, :]                          # [N, F]
        acc = jnp.zeros((N, P), jnp.float32)

        for g in range(GS):
            # bf16 G (exact 0/1) upcast once -> all arithmetic stays f32.
            Gbg = g_ref[b, g].astype(jnp.float32)                  # [N, N]

            # norm_by_neighbors: hoisted once per (b, g).
            neigh = jnp.maximum(jnp.sum(Gbg, axis=-1, keepdims=True), 1.0)
            inv_neigh = 1.0 / neigh

            for t, (power, diag) in enumerate(terms):
                idx = t * GS + g
                y = y_b[:, idx * P:(idx + 1) * P]                  # [N, P]

                Gp = Gbg
                for _ in range(power - 1):
                    Gp = jnp.dot(Gbg, Gp, preferred_element_type=jnp.float32)

                if diag:
                    # (G^p * eye) @ y  ==  diag(G^p)[:, None] * y
                    dvec = jnp.sum(Gp * eye, axis=-1, keepdims=True)
                    z = dvec * y
                else:
                    z = jnp.dot(Gp, y, preferred_element_type=jnp.float32)

                z = z * inv_neigh
                z = jnp.maximum(z, LEAKY_SLOPE * z)                # leaky relu
                acc = acc + z                                      # sum terms & GS

        # ---- finalize: relu + LayerNorm(P) ----
        a = jnp.maximum(acc, 0.0)
        mean = jnp.mean(a, axis=-1, keepdims=True)
        var = jnp.mean((a - mean) ** 2, axis=-1, keepdims=True)
        a = (a - mean) * lax.rsqrt(var + LN_EPS)
        a = a * gamma_ref[...] + beta_ref[...]
        out_cols.append(a)

    # Lane-dense output slab: [N, B_blk*P].
    out_ref[0] = jnp.concatenate(out_cols, axis=-1).astype(out_ref.dtype)


def graph_mat_layer_expression_wnorm2(G, x, W1, B1, W2, B2, gamma, beta,
                                      powers, diags, *, batch_block=None):
    """G: [B, GS, N, N], x: [B, N, C] -> [B, N, P]."""
    B, GS, N, _ = G.shape
    _, _, C = x.shape
    T, _, P, _ = W1.shape
    F = T * GS * P

    # Static term config (compile-time specialization).
    terms = tuple((int(p), bool(d))
                  for p, d in zip(np.asarray(powers), np.asarray(diags)))

    # Batch block: as large as possible while keeping >= 2 grid steps
    # (v7x megacore); must divide B.
    if batch_block is None:
        batch_block = max(1, B // 2)
    B_blk = max(d for d in range(1, batch_block + 1) if B % d == 0)
    num_blocks = B // B_blk

    # Layout plumbing done once in the wrapper (no compute hoisted):
    G_bf16 = G.astype(jnp.bfloat16)                              # exact: 0/1 entries
    W1_all = jnp.transpose(W1, (3, 0, 1, 2)).reshape(C, F)       # [C, T*GS*P]
    b1_all = B1.reshape(1, F)
    b2_all = B2.reshape(1, F)
    blocks = jnp.transpose(W2, (0, 1, 3, 2)).reshape(T * GS, P, P)   # W2[t,g].T
    W2_bd = jax.scipy.linalg.block_diag(*[blocks[i] for i in range(T * GS)])
    W2_bd = W2_bd.astype(jnp.float32)
    gamma2 = gamma.reshape(1, P)
    beta2 = beta.reshape(1, P)

    # Explicit scoped-VMEM budget (double-buffered blocks + MLP temporaries).
    vmem_est = 2 * (B_blk * GS * N * N * 2            # G block (bf16)
                    + B_blk * N * C * 4               # x block
                    + (C * F + F * F + 2 * F + 2 * P) * 4   # fused weights
                    + N * B_blk * P * 4)              # output block
    vmem_est += 4 * B_blk * N * F * 4                 # in-kernel temporaries
    vmem_limit = int(min(64 * 1024 * 1024, max(32 * 1024 * 1024, 4 * vmem_est)))

    kernel = functools.partial(_kernel, terms=terms, GS=GS, P=P, B_blk=B_blk)

    out = pl.pallas_call(
        kernel,
        out_shape=jax.ShapeDtypeStruct((num_blocks, N, B_blk * P), jnp.float32),
        grid_spec=pltpu.PrefetchScalarGridSpec(
            num_scalar_prefetch=0,
            grid=(num_blocks,),
            in_specs=[
                pl.BlockSpec((B_blk, GS, N, N), lambda i: (i, 0, 0, 0)),  # G bf16
                pl.BlockSpec((B_blk, N, C), lambda i: (i, 0, 0)),         # x
                pl.BlockSpec((C, F), lambda i: (0, 0)),                   # fused W1
                pl.BlockSpec((1, F), lambda i: (0, 0)),                   # fused b1
                pl.BlockSpec((F, F), lambda i: (0, 0)),                   # block-diag W2
                pl.BlockSpec((1, F), lambda i: (0, 0)),                   # fused b2
                pl.BlockSpec((1, P), lambda i: (0, 0)),                   # LN gamma
                pl.BlockSpec((1, P), lambda i: (0, 0)),                   # LN beta
            ],
            out_specs=pl.BlockSpec((1, N, B_blk * P), lambda i: (i, 0, 0)),
        ),
        compiler_params=pltpu.CompilerParams(
            dimension_semantics=("parallel",),
            vmem_limit_bytes=vmem_limit),
    )(G_bf16, x, W1_all, b1_all, W2_bd, b2_all, gamma2, beta2)

    # Undo the lane-dense packing: [nb, N, B_blk*P] -> [B, N, P].
    out = out.reshape(num_blocks, N, B_blk, P)
    out = jnp.transpose(out, (0, 2, 1, 3)).reshape(B, N, P)
    return out


def reference(G, x, W1, B1, W2, B2, gamma, beta, powers, diags):
    """Pure-JAX transcription of the PyTorch forward pass."""
    T, GS = W1.shape[0], W1.shape[1]
    N = G.shape[-1]
    per_term = []
    for t in range(T):
        per_g = []
        for g in range(GS):
            h = jnp.maximum(jnp.einsum('bnc,pc->bnp', x, W1[t, g]) + B1[t, g], 0.0)
            y = jnp.einsum('bnp,qp->bnq', h, W2[t, g]) + B2[t, g]
            Gg = G[:, g]
            Gp = Gg
            for _ in range(int(powers[t]) - 1):
                Gp = jnp.einsum('bkl,blm->bkm', Gg, Gp)
            if int(diags[t]):
                Gp = Gp * jnp.eye(N, dtype=Gp.dtype)
            z = jnp.einsum('bkl,blp->bkp', Gp, y)
            neigh = jnp.maximum(Gg.sum(-1), 1.0)[..., None]
            z = z / neigh
            z = jnp.where(z >= 0.0, z, LEAKY_SLOPE * z)
            per_g.append(z)
        per_term.append(jnp.stack(per_g, 0))          # [GS, B, N, P]
    terms_stack = jnp.stack(per_term, -1)             # [GS, B, N, P, T]
    xo = terms_stack.sum(-1)                          # cross_term_agg 'sum'
    xo = xo.sum(0)                                    # agg_func = sum over GS
    xo = jnp.maximum(xo, 0.0)                         # post_agg_nonlin relu
    mean = xo.mean(-1, keepdims=True)
    var = ((xo - mean) ** 2).mean(-1, keepdims=True)
    xo = (xo - mean) / jnp.sqrt(var + LN_EPS) * gamma + beta
    return xo


if __name__ == "__main__":
    B, GS, N, C, P = 4, 2, 16, 32, 32
    T = 2
    powers = np.array([1, 2], dtype=np.int32)
    diags = np.array([0, 1], dtype=np.int32)

    key = jax.random.PRNGKey(0)
    ks = jax.random.split(key, 9)
    # Nonnegative 0/1 adjacency with self loops (symmetrized, but the kernel
    # does not rely on symmetry).
    A = jax.random.uniform(ks[0], (B, GS, N, N), jnp.float32)
    G = (A > 0.6).astype(jnp.float32)
    G = jnp.maximum(G, jnp.transpose(G, (0, 1, 3, 2)))
    x = jax.random.normal(ks[1], (B, N, C), jnp.float32)

    # Deterministic parameter init (synthetic; shapes follow nn.Linear/LayerNorm).
    W1 = jax.random.normal(ks[2], (T, GS, P, C), jnp.float32) * 0.1
    B1 = jax.random.normal(ks[3], (T, GS, P), jnp.float32) * 0.05
    W2 = jax.random.normal(ks[4], (T, GS, P, P), jnp.float32) * 0.1
    B2 = jax.random.normal(ks[5], (T, GS, P), jnp.float32) * 0.05
    gamma = jax.random.normal(ks[6], (P,), jnp.float32) * 0.1 + 1.0
    beta = jax.random.normal(ks[7], (P,), jnp.float32) * 0.1

    out = graph_mat_layer_expression_wnorm2(
        G, x, W1, B1, W2, B2, gamma, beta, powers, diags)
    out = jax.block_until_ready(out)

    ref = reference(G, x, W1, B1, W2, B2, gamma, beta, powers, diags)
    np.testing.assert_allclose(np.asarray(out), np.asarray(ref),
                               rtol=1e-4, atol=1e-4)
    print("KERNEL_OK")
</pallas_src>

<mosaic_0001>
module attributes {stable_mosaic.version = 11 : i64} {
  func.func @_kernel(%arg0: i32, %arg1: memref<2x2x16x16xbf16, #tpu.memory_space<vmem>>, %arg2: memref<2x16x32xf32, #tpu.memory_space<vmem>>, %arg3: memref<32x128xf32, #tpu.memory_space<vmem>>, %arg4: memref<1x128xf32, #tpu.memory_space<vmem>>, %arg5: memref<128x128xf32, #tpu.memory_space<vmem>>, %arg6: memref<1x128xf32, #tpu.memory_space<vmem>>, %arg7: memref<1x32xf32, #tpu.memory_space<vmem>>, %arg8: memref<1x32xf32, #tpu.memory_space<vmem>>, %arg9: memref<1x16x64xf32, #tpu.memory_space<vmem>>) attributes {dimension_semantics = [#tpu.dimension_semantics<parallel>], iteration_bounds = array<i64: 2>, scalar_prefetch = 0 : i64, scratch_operands = 0 : i64, tpu.core_type = #tpu.core_type<tc>, window_params = [{transform_indices = @transform_0, window_bounds = array<i64: 2, 2, 16, 16>}, {transform_indices = @transform_1, window_bounds = array<i64: 2, 16, 32>}, {pipeline_mode = #tpu.pipeline_mode<synchronous>, transform_indices = @transform_2, window_bounds = array<i64: 32, 128>}, {pipeline_mode = #tpu.pipeline_mode<synchronous>, transform_indices = @transform_3, window_bounds = array<i64: 1, 128>}, {pipeline_mode = #tpu.pipeline_mode<synchronous>, transform_indices = @transform_4, window_bounds = array<i64: 128, 128>}, {pipeline_mode = #tpu.pipeline_mode<synchronous>, transform_indices = @transform_5, window_bounds = array<i64: 1, 128>}, {pipeline_mode = #tpu.pipeline_mode<synchronous>, transform_indices = @transform_6, window_bounds = array<i64: 1, 32>}, {pipeline_mode = #tpu.pipeline_mode<synchronous>, transform_indices = @transform_7, window_bounds = array<i64: 1, 32>}, {transform_indices = @transform_8, window_bounds = array<i64: 1, 16, 64>}]} {
    %c0 = arith.constant 0 : index
    %c0_0 = arith.constant 0 : index
    %c0_1 = arith.constant 0 : index
    %0 = vector.load %arg2[%c0, %c0_0, %c0_1] : memref<2x16x32xf32, #tpu.memory_space<vmem>>, vector<2x16x32xf32>
    %1 = vector.shape_cast %0 : vector<2x16x32xf32> to vector<32x32xf32>
    %c0_2 = arith.constant 0 : index
    %c0_3 = arith.constant 0 : index
    %2 = vector.load %arg3[%c0_2, %c0_3] : memref<32x128xf32, #tpu.memory_space<vmem>>, vector<32x128xf32>
    %cst = arith.constant dense<0.000000e+00> : vector<32x128xf32>
    %3 = tpu.matmul %1, %2, %cst {dimension_numbers = #tpu.dot_dimension_numbers<[1], [0], [0], [1], [0, 0, 1, 1], [], []>} : vector<32x32xf32>, vector<32x128xf32>, vector<32x128xf32> -> vector<32x128xf32>
    %c0_4 = arith.constant 0 : index
    %c0_5 = arith.constant 0 : index
    %4 = vector.load %arg4[%c0_4, %c0_5] : memref<1x128xf32, #tpu.memory_space<vmem>>, vector<1x128xf32>
    %5 = vector.broadcast %4 : vector<1x128xf32> to vector<32x128xf32>
    %6 = arith.addf %3, %5 : vector<32x128xf32>
    %cst_6 = arith.constant 0.000000e+00 : f32
    %7 = vector.broadcast %cst_6 : f32 to vector<32x128xf32>
    %8 = arith.maximumf %6, %7 : vector<32x128xf32>
    %c0_7 = arith.constant 0 : index
    %c0_8 = arith.constant 0 : index
    %9 = vector.load %arg5[%c0_7, %c0_8] : memref<128x128xf32, #tpu.memory_space<vmem>>, vector<128x128xf32>
    %cst_9 = arith.constant dense<0.000000e+00> : vector<32x128xf32>
    %10 = tpu.matmul %8, %9, %cst_9 {dimension_numbers = #tpu.dot_dimension_numbers<[1], [0], [0], [1], [0, 0, 1, 1], [], []>} : vector<32x128xf32>, vector<128x128xf32>, vector<32x128xf32> -> vector<32x128xf32>
    %c0_10 = arith.constant 0 : index
    %c0_11 = arith.constant 0 : index
    %11 = vector.load %arg6[%c0_10, %c0_11] : memref<1x128xf32, #tpu.memory_space<vmem>>, vector<1x128xf32>
    %12 = vector.broadcast %11 : vector<1x128xf32> to vector<32x128xf32>
    %13 = arith.addf %10, %12 : vector<32x128xf32>
    %14 = tpu.iota {dimensions = array<i32: 0>} : vector<16x16xi32>
    %15 = tpu.iota {dimensions = array<i32: 1>} : vector<16x16xi32>
    %16 = arith.cmpi eq, %14, %15 : vector<16x16xi32>
    %17 = arith.extui %16 : vector<16x16xi1> to vector<16x16xi32>
    %18 = arith.sitofp %17 : vector<16x16xi32> to vector<16x16xf32>
    %19 = vector.extract_strided_slice %13 {offsets = [0, 0], sizes = [16, 128], strides = [1, 1]} : vector<32x128xf32> to vector<16x128xf32>
    %cst_12 = arith.constant 0.000000e+00 : f32
    %20 = vector.broadcast %cst_12 : f32 to vector<16x32xf32>
    %c0_13 = arith.constant 0 : index
    %c0_14 = arith.constant 0 : index
    %c0_15 = arith.constant 0 : index
    %c0_16 = arith.constant 0 : index
    %21 = vector.load %arg1[%c0_13, %c0_14, %c0_15, %c0_16] : memref<2x2x16x16xbf16, #tpu.memory_space<vmem>>, vector<1x1x16x16xbf16>
    %22 = vector.shape_cast %21 : vector<1x1x16x16xbf16> to vector<16x16xbf16>
    %23 = arith.extf %22 : vector<16x16xbf16> to vector<16x16xf32>
    %cst_17 = arith.constant dense<0.000000e+00> : vector<16xf32>
    %24 = vector.multi_reduction <add>, %23, %cst_17 [1] : vector<16x16xf32> to vector<16xf32>
    %25 = vector.shape_cast %24 : vector<16xf32> to vector<16x1xf32>
    %cst_18 = arith.constant 1.000000e+00 : f32
    %26 = vector.broadcast %cst_18 : f32 to vector<16x1xf32>
    %27 = arith.maximumf %25, %26 : vector<16x1xf32>
    %cst_19 = arith.constant 1.000000e+00 : f32
    %28 = vector.broadcast %cst_19 : f32 to vector<16x1xf32>
    %29 = arith.divf %28, %27 : vector<16x1xf32>
    %30 = vector.extract_strided_slice %19 {offsets = [0, 0], sizes = [16, 32], strides = [1, 1]} : vector<16x128xf32> to vector<16x32xf32>
    %cst_20 = arith.constant dense<0.000000e+00> : vector<16x32xf32>
    %31 = tpu.matmul %23, %30, %cst_20 {dimension_numbers = #tpu.dot_dimension_numbers<[1], [0], [0], [1], [0, 0, 1, 1], [], []>} : vector<16x16xf32>, vector<16x32xf32>, vector<16x32xf32> -> vector<16x32xf32>
    %32 = vector.broadcast %29 : vector<16x1xf32> to vector<16x32xf32>
    %33 = arith.mulf %31, %32 : vector<16x32xf32>
    %cst_21 = arith.constant 0.00999999977 : f32
    %34 = vector.broadcast %cst_21 : f32 to vector<16x32xf32>
    %35 = arith.mulf %34, %33 : vector<16x32xf32>
    %36 = arith.maximumf %33, %35 : vector<16x32xf32>
    %37 = arith.addf %20, %36 : vector<16x32xf32>
    %38 = vector.extract_strided_slice %19 {offsets = [0, 64], sizes = [16, 32], strides = [1, 1]} : vector<16x128xf32> to vector<16x32xf32>
    %cst_22 = arith.constant dense<0.000000e+00> : vector<16x16xf32>
    %39 = tpu.matmul %23, %23, %cst_22 {dimension_numbers = #tpu.dot_dimension_numbers<[1], [0], [0], [1], [0, 0, 1, 1], [], []>} : vector<16x16xf32>, vector<16x16xf32>, vector<16x16xf32> -> vector<16x16xf32>
    %40 = arith.mulf %39, %18 : vector<16x16xf32>
    %cst_23 = arith.constant dense<0.000000e+00> : vector<16xf32>
    %41 = vector.multi_reduction <add>, %40, %cst_23 [1] : vector<16x16xf32> to vector<16xf32>
    %42 = vector.shape_cast %41 : vector<16xf32> to vector<16x1xf32>
    %43 = vector.broadcast %42 : vector<16x1xf32> to vector<16x32xf32>
    %44 = arith.mulf %43, %38 : vector<16x32xf32>
    %45 = vector.broadcast %29 : vector<16x1xf32> to vector<16x32xf32>
    %46 = arith.mulf %44, %45 : vector<16x32xf32>
    %cst_24 = arith.constant 0.00999999977 : f32
    %47 = vector.broadcast %cst_24 : f32 to vector<16x32xf32>
    %48 = arith.mulf %47, %46 : vector<16x32xf32>
    %49 = arith.maximumf %46, %48 : vector<16x32xf32>
    %50 = arith.addf %37, %49 : vector<16x32xf32>
    %c0_25 = arith.constant 0 : index
    %c1 = arith.constant 1 : index
    %c0_26 = arith.constant 0 : index
    %c0_27 = arith.constant 0 : index
    %51 = vector.load %arg1[%c0_25, %c1, %c0_26, %c0_27] : memref<2x2x16x16xbf16, #tpu.memory_space<vmem>>, vector<1x1x16x16xbf16>
    %52 = vector.shape_cast %51 : vector<1x1x16x16xbf16> to vector<16x16xbf16>
    %53 = arith.extf %52 : vector<16x16xbf16> to vector<16x16xf32>
    %cst_28 = arith.constant dense<0.000000e+00> : vector<16xf32>
    %54 = vector.multi_reduction <add>, %53, %cst_28 [1] : vector<16x16xf32> to vector<16xf32>
    %55 = vector.shape_cast %54 : vector<16xf32> to vector<16x1xf32>
    %cst_29 = arith.constant 1.000000e+00 : f32
    %56 = vector.broadcast %cst_29 : f32 to vector<16x1xf32>
    %57 = arith.maximumf %55, %56 : vector<16x1xf32>
    %cst_30 = arith.constant 1.000000e+00 : f32
    %58 = vector.broadcast %cst_30 : f32 to vector<16x1xf32>
    %59 = arith.divf %58, %57 : vector<16x1xf32>
    %60 = vector.extract_strided_slice %19 {offsets = [0, 32], sizes = [16, 32], strides = [1, 1]} : vector<16x128xf32> to vector<16x32xf32>
    %cst_31 = arith.constant dense<0.000000e+00> : vector<16x32xf32>
    %61 = tpu.matmul %53, %60, %cst_31 {dimension_numbers = #tpu.dot_dimension_numbers<[1], [0], [0], [1], [0, 0, 1, 1], [], []>} : vector<16x16xf32>, vector<16x32xf32>, vector<16x32xf32> -> vector<16x32xf32>
    %62 = vector.broadcast %59 : vector<16x1xf32> to vector<16x32xf32>
    %63 = arith.mulf %61, %62 : vector<16x32xf32>
    %cst_32 = arith.constant 0.00999999977 : f32
    %64 = vector.broadcast %cst_32 : f32 to vector<16x32xf32>
    %65 = arith.mulf %64, %63 : vector<16x32xf32>
    %66 = arith.maximumf %63, %65 : vector<16x32xf32>
    %67 = arith.addf %50, %66 : vector<16x32xf32>
    %68 = vector.extract_strided_slice %19 {offsets = [0, 96], sizes = [16, 32], strides = [1, 1]} : vector<16x128xf32> to vector<16x32xf32>
    %cst_33 = arith.constant dense<0.000000e+00> : vector<16x16xf32>
    %69 = tpu.matmul %53, %53, %cst_33 {dimension_numbers = #tpu.dot_dimension_numbers<[1], [0], [0], [1], [0, 0, 1, 1], [], []>} : vector<16x16xf32>, vector<16x16xf32>, vector<16x16xf32> -> vector<16x16xf32>
    %70 = arith.mulf %69, %18 : vector<16x16xf32>
    %cst_34 = arith.constant dense<0.000000e+00> : vector<16xf32>
    %71 = vector.multi_reduction <add>, %70, %cst_34 [1] : vector<16x16xf32> to vector<16xf32>
    %72 = vector.shape_cast %71 : vector<16xf32> to vector<16x1xf32>
    %73 = vector.broadcast %72 : vector<16x1xf32> to vector<16x32xf32>
    %74 = arith.mulf %73, %68 : vector<16x32xf32>
    %75 = vector.broadcast %59 : vector<16x1xf32> to vector<16x32xf32>
    %76 = arith.mulf %74, %75 : vector<16x32xf32>
    %cst_35 = arith.constant 0.00999999977 : f32
    %77 = vector.broadcast %cst_35 : f32 to vector<16x32xf32>
    %78 = arith.mulf %77, %76 : vector<16x32xf32>
    %79 = arith.maximumf %76, %78 : vector<16x32xf32>
    %80 = arith.addf %67, %79 : vector<16x32xf32>
    %cst_36 = arith.constant 0.000000e+00 : f32
    %81 = vector.broadcast %cst_36 : f32 to vector<16x32xf32>
    %82 = arith.maximumf %80, %81 : vector<16x32xf32>
    %cst_37 = arith.constant dense<0.000000e+00> : vector<16xf32>
    %83 = vector.multi_reduction <add>, %82, %cst_37 [1] : vector<16x32xf32> to vector<16xf32>
    %84 = vector.shape_cast %83 : vector<16xf32> to vector<16x1xf32>
    %cst_38 = arith.constant 3.200000e+01 : f32
    %85 = vector.broadcast %cst_38 : f32 to vector<16x1xf32>
    %86 = arith.divf %84, %85 : vector<16x1xf32>
    %87 = vector.broadcast %86 : vector<16x1xf32> to vector<16x32xf32>
    %88 = arith.subf %82, %87 : vector<16x32xf32>
    %89 = arith.mulf %88, %88 : vector<16x32xf32>
    %cst_39 = arith.constant dense<0.000000e+00> : vector<16xf32>
    %90 = vector.multi_reduction <add>, %89, %cst_39 [1] : vector<16x32xf32> to vector<16xf32>
    %91 = vector.shape_cast %90 : vector<16xf32> to vector<16x1xf32>
    %cst_40 = arith.constant 3.200000e+01 : f32
    %92 = vector.broadcast %cst_40 : f32 to vector<16x1xf32>
    %93 = arith.divf %91, %92 : vector<16x1xf32>
    %94 = vector.broadcast %86 : vector<16x1xf32> to vector<16x32xf32>
    %95 = arith.subf %82, %94 : vector<16x32xf32>
    %cst_41 = arith.constant 9.99999974E-6 : f32
    %96 = vector.broadcast %cst_41 : f32 to vector<16x1xf32>
    %97 = arith.addf %93, %96 : vector<16x1xf32>
    %98 = math.rsqrt %97 : vector<16x1xf32>
    %99 = vector.broadcast %98 : vector<16x1xf32> to vector<16x32xf32>
    %100 = arith.mulf %95, %99 : vector<16x32xf32>
    %c0_42 = arith.constant 0 : index
    %c0_43 = arith.constant 0 : index
    %101 = vector.load %arg7[%c0_42, %c0_43] : memref<1x32xf32, #tpu.memory_space<vmem>>, vector<1x32xf32>
    %102 = vector.broadcast %101 : vector<1x32xf32> to vector<16x32xf32>
    %103 = arith.mulf %100, %102 : vector<16x32xf32>
    %c0_44 = arith.constant 0 : index
    %c0_45 = arith.constant 0 : index
    %104 = vector.load %arg8[%c0_44, %c0_45] : memref<1x32xf32, #tpu.memory_space<vmem>>, vector<1x32xf32>
    %105 = vector.broadcast %104 : vector<1x32xf32> to vector<16x32xf32>
    %106 = arith.addf %103, %105 : vector<16x32xf32>
    %107 = vector.extract_strided_slice %13 {offsets = [16, 0], sizes = [16, 128], strides = [1, 1]} : vector<32x128xf32> to vector<16x128xf32>
    %cst_46 = arith.constant 0.000000e+00 : f32
    %108 = vector.broadcast %cst_46 : f32 to vector<16x32xf32>
    %c1_47 = arith.constant 1 : index
    %c0_48 = arith.constant 0 : index
    %c0_49 = arith.constant 0 : index
    %c0_50 = arith.constant 0 : index
    %109 = vector.load %arg1[%c1_47, %c0_48, %c0_49, %c0_50] : memref<2x2x16x16xbf16, #tpu.memory_space<vmem>>, vector<1x1x16x16xbf16>
    %110 = vector.shape_cast %109 : vector<1x1x16x16xbf16> to vector<16x16xbf16>
    %111 = arith.extf %110 : vector<16x16xbf16> to vector<16x16xf32>
    %cst_51 = arith.constant dense<0.000000e+00> : vector<16xf32>
    %112 = vector.multi_reduction <add>, %111, %cst_51 [1] : vector<16x16xf32> to vector<16xf32>
    %113 = vector.shape_cast %112 : vector<16xf32> to vector<16x1xf32>
    %cst_52 = arith.constant 1.000000e+00 : f32
    %114 = vector.broadcast %cst_52 : f32 to vector<16x1xf32>
    %115 = arith.maximumf %113, %114 : vector<16x1xf32>
    %cst_53 = arith.constant 1.000000e+00 : f32
    %116 = vector.broadcast %cst_53 : f32 to vector<16x1xf32>
    %117 = arith.divf %116, %115 : vector<16x1xf32>
    %118 = vector.extract_strided_slice %107 {offsets = [0, 0], sizes = [16, 32], strides = [1, 1]} : vector<16x128xf32> to vector<16x32xf32>
    %cst_54 = arith.constant dense<0.000000e+00> : vector<16x32xf32>
    %119 = tpu.matmul %111, %118, %cst_54 {dimension_numbers = #tpu.dot_dimension_numbers<[1], [0], [0], [1], [0, 0, 1, 1], [], []>} : vector<16x16xf32>, vector<16x32xf32>, vector<16x32xf32> -> vector<16x32xf32>
    %120 = vector.broadcast %117 : vector<16x1xf32> to vector<16x32xf32>
    %121 = arith.mulf %119, %120 : vector<16x32xf32>
    %cst_55 = arith.constant 0.00999999977 : f32
    %122 = vector.broadcast %cst_55 : f32 to vector<16x32xf32>
    %123 = arith.mulf %122, %121 : vector<16x32xf32>
    %124 = arith.maximumf %121, %123 : vector<16x32xf32>
    %125 = arith.addf %108, %124 : vector<16x32xf32>
    %126 = vector.extract_strided_slice %107 {offsets = [0, 64], sizes = [16, 32], strides = [1, 1]} : vector<16x128xf32> to vector<16x32xf32>
    %cst_56 = arith.constant dense<0.000000e+00> : vector<16x16xf32>
    %127 = tpu.matmul %111, %111, %cst_56 {dimension_numbers = #tpu.dot_dimension_numbers<[1], [0], [0], [1], [0, 0, 1, 1], [], []>} : vector<16x16xf32>, vector<16x16xf32>, vector<16x16xf32> -> vector<16x16xf32>
    %128 = arith.mulf %127, %18 : vector<16x16xf32>
    %cst_57 = arith.constant dense<0.000000e+00> : vector<16xf32>
    %129 = vector.multi_reduction <add>, %128, %cst_57 [1] : vector<16x16xf32> to vector<16xf32>
    %130 = vector.shape_cast %129 : vector<16xf32> to vector<16x1xf32>
    %131 = vector.broadcast %130 : vector<16x1xf32> to vector<16x32xf32>
    %132 = arith.mulf %131, %126 : vector<16x32xf32>
    %133 = vector.broadcast %117 : vector<16x1xf32> to vector<16x32xf32>
    %134 = arith.mulf %132, %133 : vector<16x32xf32>
    %cst_58 = arith.constant 0.00999999977 : f32
    %135 = vector.broadcast %cst_58 : f32 to vector<16x32xf32>
    %136 = arith.mulf %135, %134 : vector<16x32xf32>
    %137 = arith.maximumf %134, %136 : vector<16x32xf32>
    %138 = arith.addf %125, %137 : vector<16x32xf32>
    %c1_59 = arith.constant 1 : index
    %c1_60 = arith.constant 1 : index
    %c0_61 = arith.constant 0 : index
    %c0_62 = arith.constant 0 : index
    %139 = vector.load %arg1[%c1_59, %c1_60, %c0_61, %c0_62] : memref<2x2x16x16xbf16, #tpu.memory_space<vmem>>, vector<1x1x16x16xbf16>
    %140 = vector.shape_cast %139 : vector<1x1x16x16xbf16> to vector<16x16xbf16>
    %141 = arith.extf %140 : vector<16x16xbf16> to vector<16x16xf32>
    %cst_63 = arith.constant dense<0.000000e+00> : vector<16xf32>
    %142 = vector.multi_reduction <add>, %141, %cst_63 [1] : vector<16x16xf32> to vector<16xf32>
    %143 = vector.shape_cast %142 : vector<16xf32> to vector<16x1xf32>
    %cst_64 = arith.constant 1.000000e+00 : f32
    %144 = vector.broadcast %cst_64 : f32 to vector<16x1xf32>
    %145 = arith.maximumf %143, %144 : vector<16x1xf32>
    %cst_65 = arith.constant 1.000000e+00 : f32
    %146 = vector.broadcast %cst_65 : f32 to vector<16x1xf32>
    %147 = arith.divf %146, %145 : vector<16x1xf32>
    %148 = vector.extract_strided_slice %107 {offsets = [0, 32], sizes = [16, 32], strides = [1, 1]} : vector<16x128xf32> to vector<16x32xf32>
    %cst_66 = arith.constant dense<0.000000e+00> : vector<16x32xf32>
    %149 = tpu.matmul %141, %148, %cst_66 {dimension_numbers = #tpu.dot_dimension_numbers<[1], [0], [0], [1], [0, 0, 1, 1], [], []>} : vector<16x16xf32>, vector<16x32xf32>, vector<16x32xf32> -> vector<16x32xf32>
    %150 = vector.broadcast %147 : vector<16x1xf32> to vector<16x32xf32>
    %151 = arith.mulf %149, %150 : vector<16x32xf32>
    %cst_67 = arith.constant 0.00999999977 : f32
    %152 = vector.broadcast %cst_67 : f32 to vector<16x32xf32>
    %153 = arith.mulf %152, %151 : vector<16x32xf32>
    %154 = arith.maximumf %151, %153 : vector<16x32xf32>
    %155 = arith.addf %138, %154 : vector<16x32xf32>
    %156 = vector.extract_strided_slice %107 {offsets = [0, 96], sizes = [16, 32], strides = [1, 1]} : vector<16x128xf32> to vector<16x32xf32>
    %cst_68 = arith.constant dense<0.000000e+00> : vector<16x16xf32>
    %157 = tpu.matmul %141, %141, %cst_68 {dimension_numbers = #tpu.dot_dimension_numbers<[1], [0], [0], [1], [0, 0, 1, 1], [], []>} : vector<16x16xf32>, vector<16x16xf32>, vector<16x16xf32> -> vector<16x16xf32>
    %158 = arith.mulf %157, %18 : vector<16x16xf32>
    %cst_69 = arith.constant dense<0.000000e+00> : vector<16xf32>
    %159 = vector.multi_reduction <add>, %158, %cst_69 [1] : vector<16x16xf32> to vector<16xf32>
    %160 = vector.shape_cast %159 : vector<16xf32> to vector<16x1xf32>
    %161 = vector.broadcast %160 : vector<16x1xf32> to vector<16x32xf32>
    %162 = arith.mulf %161, %156 : vector<16x32xf32>
    %163 = vector.broadcast %147 : vector<16x1xf32> to vector<16x32xf32>
    %164 = arith.mulf %162, %163 : vector<16x32xf32>
    %cst_70 = arith.constant 0.00999999977 : f32
    %165 = vector.broadcast %cst_70 : f32 to vector<16x32xf32>
    %166 = arith.mulf %165, %164 : vector<16x32xf32>
    %167 = arith.maximumf %164, %166 : vector<16x32xf32>
    %168 = arith.addf %155, %167 : vector<16x32xf32>
    %cst_71 = arith.constant 0.000000e+00 : f32
    %169 = vector.broadcast %cst_71 : f32 to vector<16x32xf32>
    %170 = arith.maximumf %168, %169 : vector<16x32xf32>
    %cst_72 = arith.constant dense<0.000000e+00> : vector<16xf32>
    %171 = vector.multi_reduction <add>, %170, %cst_72 [1] : vector<16x32xf32> to vector<16xf32>
    %172 = vector.shape_cast %171 : vector<16xf32> to vector<16x1xf32>
    %cst_73 = arith.constant 3.200000e+01 : f32
    %173 = vector.broadcast %cst_73 : f32 to vector<16x1xf32>
    %174 = arith.divf %172, %173 : vector<16x1xf32>
    %175 = vector.broadcast %174 : vector<16x1xf32> to vector<16x32xf32>
    %176 = arith.subf %170, %175 : vector<16x32xf32>
    %177 = arith.mulf %176, %176 : vector<16x32xf32>
    %cst_74 = arith.constant dense<0.000000e+00> : vector<16xf32>
    %178 = vector.multi_reduction <add>, %177, %cst_74 [1] : vector<16x32xf32> to vector<16xf32>
    %179 = vector.shape_cast %178 : vector<16xf32> to vector<16x1xf32>
    %cst_75 = arith.constant 3.200000e+01 : f32
    %180 = vector.broadcast %cst_75 : f32 to vector<16x1xf32>
    %181 = arith.divf %179, %180 : vector<16x1xf32>
    %182 = vector.broadcast %174 : vector<16x1xf32> to vector<16x32xf32>
    %183 = arith.subf %170, %182 : vector<16x32xf32>
    %cst_76 = arith.constant 9.99999974E-6 : f32
    %184 = vector.broadcast %cst_76 : f32 to vector<16x1xf32>
    %185 = arith.addf %181, %184 : vector<16x1xf32>
    %186 = math.rsqrt %185 : vector<16x1xf32>
    %187 = vector.broadcast %186 : vector<16x1xf32> to vector<16x32xf32>
    %188 = arith.mulf %183, %187 : vector<16x32xf32>
    %c0_77 = arith.constant 0 : index
    %c0_78 = arith.constant 0 : index
    %189 = vector.load %arg7[%c0_77, %c0_78] : memref<1x32xf32, #tpu.memory_space<vmem>>, vector<1x32xf32>
    %190 = vector.broadcast %189 : vector<1x32xf32> to vector<16x32xf32>
    %191 = arith.mulf %188, %190 : vector<16x32xf32>
    %c0_79 = arith.constant 0 : index
    %c0_80 = arith.constant 0 : index
    %192 = vector.load %arg8[%c0_79, %c0_80] : memref<1x32xf32, #tpu.memory_space<vmem>>, vector<1x32xf32>
    %193 = vector.broadcast %192 : vector<1x32xf32> to vector<16x32xf32>
    %194 = arith.addf %191, %193 : vector<16x32xf32>
    %195 = tpu.concatenate %106, %194 in 1 : vector<16x32xf32>, vector<16x32xf32> -> vector<16x64xf32>
    %c0_81 = arith.constant 0 : index
    %c0_82 = arith.constant 0 : index
    %c0_83 = arith.constant 0 : index
    %196 = vector.load %arg9[%c0_81, %c0_82, %c0_83] : memref<1x16x64xf32, #tpu.memory_space<vmem>>, vector<1x16x64xf32>
    %197 = vector.shape_cast %196 : vector<1x16x64xf32> to vector<16x64xf32>
    %198 = vector.shape_cast %195 : vector<16x64xf32> to vector<1x16x64xf32>
    tpu.vector_store %arg9[%c0_81, %c0_82, %c0_83], %198 {strides = array<i32>} : memref<1x16x64xf32, #tpu.memory_space<vmem>>, vector<1x16x64xf32>,
    return
  }
  func.func @transform_0(%arg0: i32) -> (i32, i32, i32, i32) {
    %c0_i32 = arith.constant 0 : i32
    %c0_i32_0 = arith.constant 0 : i32
    %c0_i32_1 = arith.constant 0 : i32
    %c0_i32_2 = arith.constant 0 : i32
    return %arg0, %c0_i32, %c0_i32_0, %c0_i32_1 : i32, i32, i32, i32
  }
  func.func @transform_1(%arg0: i32) -> (i32, i32, i32) {
    %c0_i32 = arith.constant 0 : i32
    %c0_i32_0 = arith.constant 0 : i32
    %c0_i32_1 = arith.constant 0 : i32
    return %arg0, %c0_i32, %c0_i32_0 : i32, i32, i32
  }
  func.func @transform_2(%arg0: i32) -> (i32, i32) {
    %c0_i32 = arith.constant 0 : i32
    %c0_i32_0 = arith.constant 0 : i32
    %c0_i32_1 = arith.constant 0 : i32
    return %c0_i32, %c0_i32_0 : i32, i32
  }
  func.func @transform_3(%arg0: i32) -> (i32, i32) {
    %c0_i32 = arith.constant 0 : i32
    %c0_i32_0 = arith.constant 0 : i32
    %c0_i32_1 = arith.constant 0 : i32
    return %c0_i32, %c0_i32_0 : i32, i32
  }
  func.func @transform_4(%arg0: i32) -> (i32, i32) {
    %c0_i32 = arith.constant 0 : i32
    %c0_i32_0 = arith.constant 0 : i32
    %c0_i32_1 = arith.constant 0 : i32
    return %c0_i32, %c0_i32_0 : i32, i32
  }
  func.func @transform_5(%arg0: i32) -> (i32, i32) {
    %c0_i32 = arith.constant 0 : i32
    %c0_i32_0 = arith.constant 0 : i32
    %c0_i32_1 = arith.constant 0 : i32
    return %c0_i32, %c0_i32_0 : i32, i32
  }
  func.func @transform_6(%arg0: i32) -> (i32, i32) {
    %c0_i32 = arith.constant 0 : i32
    %c0_i32_0 = arith.constant 0 : i32
    %c0_i32_1 = arith.constant 0 : i32
    return %c0_i32, %c0_i32_0 : i32, i32
  }
  func.func @transform_7(%arg0: i32) -> (i32, i32) {
    %c0_i32 = arith.constant 0 : i32
    %c0_i32_0 = arith.constant 0 : i32
    %c0_i32_1 = arith.constant 0 : i32
    return %c0_i32, %c0_i32_0 : i32, i32
  }
  func.func @transform_8(%arg0: i32) -> (i32, i32, i32) {
    %c0_i32 = arith.constant 0 : i32
    %c0_i32_0 = arith.constant 0 : i32
    %c0_i32_1 = arith.constant 0 : i32
    return %arg0, %c0_i32, %c0_i32_0 : i32, i32, i32
  }
}

</mosaic_0001>

<llo_original>
// kernel: tpu_custom_call.1
$region0: #{tpu_custom_call.1}
  #allocation0 [shape = 'u32[]', space=smem, size = 0x4, offset = 0x4, fixed_abs, tag = 'smem constant byte address 0x4 - core index']
  #allocation1 [shape = 'u32[144,128]{1,0:T(1,128)}', space=vmem, size = 0x12000, scoped, tag = 'internal scratch']
  %s0 = inlined_call_operand.hbm [shape: bf16[4,2,16,16], index: 0, kind: input, shape index: {}]
  %s1 = inlined_call_operand.hbm [shape: f32[4,16,32], index: 1, kind: input, shape index: {}]
  %s2 = inlined_call_operand.hbm [shape: f32[32,128], index: 2, kind: input, shape index: {}]
  %s3 = inlined_call_operand.vmem [shape: f32[1,128], index: 3, kind: input, shape index: {}]
  %s4 = inlined_call_operand.hbm [shape: f32[128,128], index: 4, kind: input, shape index: {}]
  %s5 = inlined_call_operand.vmem [shape: f32[1,128], index: 5, kind: input, shape index: {}]
  %s6 = inlined_call_operand.vmem [shape: f32[1,32], index: 6, kind: input, shape index: {}]
  %s7 = inlined_call_operand.vmem [shape: f32[1,32], index: 7, kind: input, shape index: {}]
  %s8 = inlined_call_operand.hbm [shape: f32[2,16,64], index: 8, kind: output, shape index: {}]
  %s9 = sld [smem:[#allocation0]]
  $region81: #{tpu_custom_call.1} parent=0
    _
  %s11 = ssub.s32 1, %s9
  %s12 = scalar_select 0, %s11, %s9
  $region1: #{tpu_custom_call.1} parent=0
    #allocation2 [shape = 'u8[32768]{0}', space=vmem, size = 0x8000, scoped, tag = 'input window, operand 0']
    #allocation3 [shape = 's32[2]{0}', space=sflag, size = 0x8, scoped, tag = 'scoped memory for tpu_custom_call.1']
    #allocation4 [shape = 's32[2]{0}', space=sflag, size = 0x8, scoped, tag = 'scoped memory for tpu_custom_call.1']
    #allocation5 [shape = 'u8[32768]{0}', space=vmem, size = 0x8000, scoped, tag = 'input window, operand 1']
    #allocation6 [shape = 's32[2]{0}', space=sflag, size = 0x8, scoped, tag = 'scoped memory for tpu_custom_call.1']
    #allocation7 [shape = 'u8[16384]{0}', space=vmem, size = 0x4000, scoped, tag = 'input window, operand 2, single buffered']
    #allocation8 [shape = 'u8[65536]{0}', space=vmem, size = 0x10000, scoped, tag = 'input window, operand 4, single buffered']
    #allocation9 [shape = 's32[1]{0}', space=sflag, size = 0x4, scoped, tag = 'scoped memory for tpu_custom_call.1']
    #allocation10 [shape = 'u8[16384]{0}', space=vmem, size = 0x4000, scoped, tag = 'output window, operand 0']
    %13 = vsyncpa [#allocation3], 0
    %s14 = scalar_lea.sflag [#allocation3], 1
    %15 = vsyncpa %s14, 0
    %16 = vsyncpa [#allocation6], 0
    %s17 = scalar_lea.sflag [#allocation6], 1
    %18 = vsyncpa %s17, 0
    %19 = vsyncpa [#allocation9], 0
    %20 = vsyncpa [#allocation4], 0
    %s21 = scalar_lea.sflag [#allocation4], 1
    %22 = vsyncpa %s21, 0
    loop: start=0, step=1, limit=4
    $region2: #{tpu_custom_call.1} parent=1 // loop_pre_header
      _
    $region3: #{tpu_custom_call.1} parent=1 // loop_header
      %s24 = sphi 0, %s28
      %p25 = scmp.ge.s32.totalorder %s24, 4
      %s34 = sphi 0, %s36
      %s37 = sphi 0, %s34
      %s38 = sphi 0, %s37
      %s54 = sphi 0, %s38
      %s60 = sphi 0, %s62
      %s63 = sphi 0, %s60
      %s64 = sphi 0, %s63
      %s80 = sphi 0, %s64
      %s84 = sphi 0, %s84
      %s86 = sphi 0, %s84
      %s87 = sphi 0, %s86
      %s101 = sphi 0, %s87
      %s105 = sphi 0, %s105
      %s107 = sphi 0, %s105
      %s108 = sphi 0, %s107
      %s122 = sphi 0, %s108
      %s126 = sphi 0, %s126
      %s128 = sphi 0, %s126
      %s129 = sphi 0, %s128
      %s143 = sphi 0, %s129
      %s147 = sphi 0, %s147
      %s149 = sphi 0, %s147
      %s150 = sphi 0, %s149
      %s164 = sphi 0, %s150
      %s168 = sphi 0, %s168
      %s170 = sphi 0, %s168
      %s171 = sphi 0, %s170
      %s185 = sphi 0, %s171
      %s189 = sphi 0, %s189
      %s191 = sphi 0, %s189
      %s192 = sphi 0, %s191
      %s206 = sphi 0, %s192
      %s212 = sphi 0, %s214
      %s215 = sphi 0, %s212
      %s216 = sphi 0, %s215
      %s232 = sphi 0, %s216
    $region4: #{tpu_custom_call.1} parent=1 // loop_header_branch
      %27 = sbr.rel (%p25) target = $region8
    $region5: #{tpu_custom_call.1} parent=1 // loop_body
      %s29 = ssub.s32 %s24, 1
      %s30 = ssub.s32 %s24, 2
      %s31 = sadd.s32 %s24, 1
      %s32 = ssub.s32 %s24, %s31
      %p33 = scmp.eq.s32.totalorder %s32, 0
      %s35 = sadd.s32 %s34, 1
      %s36 = scalar_select %p33, %s34, %s35
      %p39 = pneg %p33
      %p40 = scmp.eq.s32.totalorder %s24, 1
      %p41 = por %p39, %p40
      %p42 = scmp.ne.s32.totalorder %s34, %s37
      %p43 = scmp.eq.s32.totalorder %s24, 0
      %p44 = por %p42, %p43
      %p45 = scmp.ne.s32.totalorder %s34, %s37
      %p46 = scmp.eq.s32.totalorder %s29, 1
      %p47 = por %p45, %p46
      %p48 = scmp.ne.s32.totalorder %s37, %s38
      %p49 = scmp.eq.s32.totalorder %s29, 0
      %p50 = por %p48, %p49
      %p51 = scmp.ne.s32.totalorder %s37, %s38
      %p52 = scmp.eq.s32.totalorder %s30, 1
      %p53 = por %p51, %p52
      %p55 = scmp.ne.s32.totalorder %s38, %s54
      %p56 = scmp.eq.s32.totalorder %s30, 0
      %p57 = por %p55, %p56
      %s58 = ssub.s32 %s24, %s31
      %p59 = scmp.eq.s32.totalorder %s58, 0
      %s61 = sadd.s32 %s60, 1
      %s62 = scalar_select %p59, %s60, %s61
      %p65 = pneg %p59
      %p66 = scmp.eq.s32.totalorder %s24, 1
      %p67 = por %p65, %p66
      %p68 = scmp.ne.s32.totalorder %s60, %s63
      %p69 = scmp.eq.s32.totalorder %s24, 0
      %p70 = por %p68, %p69
      %p71 = scmp.ne.s32.totalorder %s60, %s63
      %p72 = scmp.eq.s32.totalorder %s29, 1
      %p73 = por %p71, %p72
      %p74 = scmp.ne.s32.totalorder %s63, %s64
      %p75 = scmp.eq.s32.totalorder %s29, 0
      %p76 = por %p74, %p75
      %p77 = scmp.ne.s32.totalorder %s63, %s64
      %p78 = scmp.eq.s32.totalorder %s30, 1
      %p79 = por %p77, %p78
      %p81 = scmp.ne.s32.totalorder %s64, %s80
      %p82 = scmp.eq.s32.totalorder %s30, 0
      %p83 = por %p81, %p82
      %s85 = sadd.s32 %s84, 1
      %p88 = scmp.eq.s32.totalorder %s24, 1
      %p89 = scmp.ne.s32.totalorder %s84, %s86
      %p90 = scmp.eq.s32.totalorder %s24, 0
      %p91 = por %p89, %p90
      %p92 = scmp.ne.s32.totalorder %s84, %s86
      %p93 = scmp.eq.s32.totalorder %s29, 1
      %p94 = por %p92, %p93
      %p95 = scmp.ne.s32.totalorder %s86, %s87
      %p96 = scmp.eq.s32.totalorder %s29, 0
      %p97 = por %p95, %p96
      %p98 = scmp.ne.s32.totalorder %s86, %s87
      %p99 = scmp.eq.s32.totalorder %s30, 1
      %p100 = por %p98, %p99
      %p102 = scmp.ne.s32.totalorder %s87, %s101
      %p103 = scmp.eq.s32.totalorder %s30, 0
      %p104 = por %p102, %p103
      %s106 = sadd.s32 %s105, 1
      %p109 = scmp.eq.s32.totalorder %s24, 1
      %p110 = scmp.ne.s32.totalorder %s105, %s107
      %p111 = scmp.eq.s32.totalorder %s24, 0
      %p112 = por %p110, %p111
      %p113 = scmp.ne.s32.totalorder %s105, %s107
      %p114 = scmp.eq.s32.totalorder %s29, 1
      %p115 = por %p113, %p114
      %p116 = scmp.ne.s32.totalorder %s107, %s108
      %p117 = scmp.eq.s32.totalorder %s29, 0
      %p118 = por %p116, %p117
      %p119 = scmp.ne.s32.totalorder %s107, %s108
      %p120 = scmp.eq.s32.totalorder %s30, 1
      %p121 = por %p119, %p120
      %p123 = scmp.ne.s32.totalorder %s108, %s122
      %p124 = scmp.eq.s32.totalorder %s30, 0
      %p125 = por %p123, %p124
      %s127 = sadd.s32 %s126, 1
      %p130 = scmp.eq.s32.totalorder %s24, 1
      %p131 = scmp.ne.s32.totalorder %s126, %s128
      %p132 = scmp.eq.s32.totalorder %s24, 0
      %p133 = por %p131, %p132
      %p134 = scmp.ne.s32.totalorder %s126, %s128
      %p135 = scmp.eq.s32.totalorder %s29, 1
      %p136 = por %p134, %p135
      %p137 = scmp.ne.s32.totalorder %s128, %s129
      %p138 = scmp.eq.s32.totalorder %s29, 0
      %p139 = por %p137, %p138
      %p140 = scmp.ne.s32.totalorder %s128, %s129
      %p141 = scmp.eq.s32.totalorder %s30, 1
      %p142 = por %p140, %p141
      %p144 = scmp.ne.s32.totalorder %s129, %s143
      %p145 = scmp.eq.s32.totalorder %s30, 0
      %p146 = por %p144, %p145
      %s148 = sadd.s32 %s147, 1
      %p151 = scmp.eq.s32.totalorder %s24, 1
      %p152 = scmp.ne.s32.totalorder %s147, %s149
      %p153 = scmp.eq.s32.totalorder %s24, 0
      %p154 = por %p152, %p153
      %p155 = scmp.ne.s32.totalorder %s147, %s149
      %p156 = scmp.eq.s32.totalorder %s29, 1
      %p157 = por %p155, %p156
      %p158 = scmp.ne.s32.totalorder %s149, %s150
      %p159 = scmp.eq.s32.totalorder %s29, 0
      %p160 = por %p158, %p159
      %p161 = scmp.ne.s32.totalorder %s149, %s150
      %p162 = scmp.eq.s32.totalorder %s30, 1
      %p163 = por %p161, %p162
      %p165 = scmp.ne.s32.totalorder %s150, %s164
      %p166 = scmp.eq.s32.totalorder %s30, 0
      %p167 = por %p165, %p166
      %s169 = sadd.s32 %s168, 1
      %p172 = scmp.eq.s32.totalorder %s24, 1
      %p173 = scmp.ne.s32.totalorder %s168, %s170
      %p174 = scmp.eq.s32.totalorder %s24, 0
      %p175 = por %p173, %p174
      %p176 = scmp.ne.s32.totalorder %s168, %s170
      %p177 = scmp.eq.s32.totalorder %s29, 1
      %p178 = por %p176, %p177
      %p179 = scmp.ne.s32.totalorder %s170, %s171
      %p180 = scmp.eq.s32.totalorder %s29, 0
      %p181 = por %p179, %p180
      %p182 = scmp.ne.s32.totalorder %s170, %s171
      %p183 = scmp.eq.s32.totalorder %s30, 1
      %p184 = por %p182, %p183
      %p186 = scmp.ne.s32.totalorder %s171, %s185
      %p187 = scmp.eq.s32.totalorder %s30, 0
      %p188 = por %p186, %p187
      %s190 = sadd.s32 %s189, 1
      %p193 = scmp.eq.s32.totalorder %s24, 1
      %p194 = scmp.ne.s32.totalorder %s189, %s191
      %p195 = scmp.eq.s32.totalorder %s24, 0
      %p196 = por %p194, %p195
      %p197 = scmp.ne.s32.totalorder %s189, %s191
      %p198 = scmp.eq.s32.totalorder %s29, 1
      %p199 = por %p197, %p198
      %p200 = scmp.ne.s32.totalorder %s191, %s192
      %p201 = scmp.eq.s32.totalorder %s29, 0
      %p202 = por %p200, %p201
      %p203 = scmp.ne.s32.totalorder %s191, %s192
      %p204 = scmp.eq.s32.totalorder %s30, 1
      %p205 = por %p203, %p204
      %p207 = scmp.ne.s32.totalorder %s192, %s206
      %p208 = scmp.eq.s32.totalorder %s30, 0
      %p209 = por %p207, %p208
      %s210 = ssub.s32 %s24, %s31
      %p211 = scmp.eq.s32.totalorder %s210, 0
      %s213 = sadd.s32 %s212, 1
      %s214 = scalar_select %p211, %s212, %s213
      %p217 = pneg %p211
      %p218 = scmp.eq.s32.totalorder %s24, 1
      %p219 = por %p217, %p218
      %p220 = scmp.ne.s32.totalorder %s212, %s215
      %p221 = scmp.eq.s32.totalorder %s24, 0
      %p222 = por %p220, %p221
      %p223 = scmp.ne.s32.totalorder %s212, %s215
      %p224 = scmp.eq.s32.totalorder %s29, 1
      %p225 = por %p223, %p224
      %p226 = scmp.ne.s32.totalorder %s215, %s216
      %p227 = scmp.eq.s32.totalorder %s29, 0
      %p228 = por %p226, %p227
      %p229 = scmp.ne.s32.totalorder %s215, %s216
      %p230 = scmp.eq.s32.totalorder %s30, 1
      %p231 = por %p229, %p230
      %p233 = scmp.ne.s32.totalorder %s216, %s232
      %p234 = scmp.eq.s32.totalorder %s30, 0
      %p235 = por %p233, %p234
      %p236 = scmp.le.s32.totalorder 1, %s24
      %p237 = scmp.lt.s32.totalorder %s24, 3
      %p238 = pnand %p236, %p237
      %p239 = pneg %p238
      // Predicated region
      $region9: #{tpu_custom_call.1} parent=5 // pred_check
        _
      $region10: #{tpu_custom_call.1} parent=5 // pred_check_branch
        %241 = sbr.rel (%p238) target = $region12
      $region11: #{tpu_custom_call.1} parent=5 // pred_region
        %s242 = ssub.s32 %s24, 1
        // Predicated region
        $region13: #{tpu_custom_call.1} parent=11 // pred_check
          %p243 = pneg %p97
        $region14: #{tpu_custom_call.1} parent=11 // pred_check_branch
          %245 = sbr.rel (%p243) target = $region16
        $region15: #{tpu_custom_call.1} parent=11 // pred_region
          %s247 = ssub.s32 512, 512
          %248 = vsyncadd [#allocation6], %s247
          %s249 = sshll.u32 [#allocation7], 4
          %s250 = int_to_ptr.vmem [resolvable:$true] %s249
          %255 = dma.hbm_to_vmem [thread:$0]  %s2, 512, %s250, [#allocation6], 128, 128, 8
        $region16: #{tpu_custom_call.1} parent=11 // pred_fallthru
          _
        // Predicated region
        $region17: #{tpu_custom_call.1} parent=11 // pred_check
          %p256 = pneg %p118
        $region18: #{tpu_custom_call.1} parent=11 // pred_check_branch
          %258 = sbr.rel (%p256) target = $region20
        $region19: #{tpu_custom_call.1} parent=11 // pred_region
          _
        $region20: #{tpu_custom_call.1} parent=11 // pred_fallthru
          _
        // Predicated region
        $region21: #{tpu_custom_call.1} parent=11 // pred_check
          %p259 = pneg %p139
        $region22: #{tpu_custom_call.1} parent=11 // pred_check_branch
          %261 = sbr.rel (%p259) target = $region24
        $region23: #{tpu_custom_call.1} parent=11 // pred_region
          %s263 = ssub.s32 2048, 2048
          %264 = vsyncadd [#allocation9], %s263
          %s265 = sshll.u32 [#allocation8], 4
          %s266 = int_to_ptr.vmem [resolvable:$true] %s265
          %271 = dma.hbm_to_vmem [thread:$0]  %s4, 2048, %s266, [#allocation9], 128, 128, 8
        $region24: #{tpu_custom_call.1} parent=11 // pred_fallthru
          _
        // Predicated region
        $region25: #{tpu_custom_call.1} parent=11 // pred_check
          %p272 = pneg %p160
        $region26: #{tpu_custom_call.1} parent=11 // pred_check_branch
          %274 = sbr.rel (%p272) target = $region28
        $region27: #{tpu_custom_call.1} parent=11 // pred_region
          _
        $region28: #{tpu_custom_call.1} parent=11 // pred_fallthru
          _
        // Predicated region
        $region29: #{tpu_custom_call.1} parent=11 // pred_check
          %p275 = pneg %p181
        $region30: #{tpu_custom_call.1} parent=11 // pred_check_branch
          %277 = sbr.rel (%p275) target = $region32
        $region31: #{tpu_custom_call.1} parent=11 // pred_region
          _
        $region32: #{tpu_custom_call.1} parent=11 // pred_fallthru
          _
        // Predicated region
        $region33: #{tpu_custom_call.1} parent=11 // pred_check
          %p278 = pneg %p202
        $region34: #{tpu_custom_call.1} parent=11 // pred_check_branch
          %280 = sbr.rel (%p278) target = $region36
        $region35: #{tpu_custom_call.1} parent=11 // pred_region
          _
        $region36: #{tpu_custom_call.1} parent=11 // pred_fallthru
          _
      $region12: #{tpu_custom_call.1} parent=5 // pred_fallthru
        _
      %p281 = scmp.lt.s32.totalorder %s24, 2
      // Predicated region
      $region37: #{tpu_custom_call.1} parent=5 // pred_check
        %p282 = pneg %p281
      $region38: #{tpu_custom_call.1} parent=5 // pred_check_branch
        %284 = sbr.rel (%p282) target = $region40
      $region39: #{tpu_custom_call.1} parent=5 // pred_region
        // Predicated region
        $region41: #{tpu_custom_call.1} parent=39 // pred_check
          %p285 = pneg %p44
        $region42: #{tpu_custom_call.1} parent=39 // pred_check_branch
          %287 = sbr.rel (%p285) target = $region44
        $region43: #{tpu_custom_call.1} parent=39 // pred_region
          %s288 = sand.u32 %s34, 1
          %s289 = scalar_lea.sflag [#allocation3], %s288
          %s290 = sand.u32 %s34, 1
          %s291 = smul.addr %s290, 32
          %s292 = scalar_lea.vmem [#allocation2], %s291
          %s293 = smul.u32 2, %s24
          %s295 = ssub.s32 512, 512
          %296 = vsyncadd %s289, %s295
          %s297 = smul.addr %s293, 4
          %s298 = smul.addr %s297, 64
          %s299 = scalar_lea.hbm %s0, %s298
          %s300 = sshll.u32 %s292, 4
          %s301 = int_to_ptr.vmem [resolvable:$true] %s300
          %306 = dma.hbm_to_vmem [thread:$0]  %s299, 512, %s301, %s289, 64, 64, 4
        $region44: #{tpu_custom_call.1} parent=39 // pred_fallthru
          _
        // Predicated region
        $region45: #{tpu_custom_call.1} parent=39 // pred_check
          %p307 = pneg %p70
        $region46: #{tpu_custom_call.1} parent=39 // pred_check_branch
          %309 = sbr.rel (%p307) target = $region48
        $region47: #{tpu_custom_call.1} parent=39 // pred_region
          %s310 = sand.u32 %s24, 1
          %s311 = scalar_lea.sflag [#allocation6], %s310
          %s312 = sand.u32 %s60, 1
          %s313 = smul.addr %s312, 32
          %s314 = scalar_lea.vmem [#allocation5], %s313
          %s315 = smul.u32 2, %s24
          %s317 = ssub.s32 512, 512
          %318 = vsyncadd %s311, %s317
          %s319 = smul.addr %s315, 2
          %s320 = smul.addr %s319, 128
          %s321 = scalar_lea.hbm %s1, %s320
          %s322 = sshll.u32 %s314, 4
          %s323 = int_to_ptr.vmem [resolvable:$true] %s322
          %328 = dma.hbm_to_vmem [thread:$0]  %s321, 512, %s323, %s311, 128, 128, 8
        $region48: #{tpu_custom_call.1} parent=39 // pred_fallthru
          _
      $region40: #{tpu_custom_call.1} parent=5 // pred_fallthru
        _
      %p329 = scmp.le.s32.totalorder 1, %s24
      %p330 = scmp.lt.s32.totalorder %s24, 3
      %p331 = pnand %p329, %p330
      %p332 = pneg %p331
      // Predicated region
      $region49: #{tpu_custom_call.1} parent=5 // pred_check
        _
      $region50: #{tpu_custom_call.1} parent=5 // pred_check_branch
        %334 = sbr.rel (%p331) target = $region52
      $region51: #{tpu_custom_call.1} parent=5 // pred_region
        %s335 = ssub.s32 %s24, 1
        %s336 = sand.u32 %s37, 1
        %s337 = scalar_lea.sflag [#allocation3], %s336
        %s338 = sand.u32 %s37, 1
        %s339 = smul.addr %s338, 32
        %s340 = scalar_lea.vmem [#allocation2], %s339
        // Predicated region
        $region53: #{tpu_custom_call.1} parent=51 // pred_check
          %p341 = pneg %p50
        $region54: #{tpu_custom_call.1} parent=51 // pred_check_branch
          %343 = sbr.rel (%p341) target = $region56
        $region55: #{tpu_custom_call.1} parent=51 // pred_region
          %344 = dma.done %s337, 512
        $region56: #{tpu_custom_call.1} parent=51 // pred_fallthru
          _
        %s345 = sand.u32 %s29, 1
        %s346 = scalar_lea.sflag [#allocation6], %s345
        %s347 = sand.u32 %s63, 1
        %s348 = smul.addr %s347, 32
        %s349 = scalar_lea.vmem [#allocation5], %s348
        // Predicated region
        $region57: #{tpu_custom_call.1} parent=51 // pred_check
          %p350 = pneg %p76
        $region58: #{tpu_custom_call.1} parent=51 // pred_check_branch
          %352 = sbr.rel (%p350) target = $region60
        $region59: #{tpu_custom_call.1} parent=51 // pred_region
          %353 = dma.done %s346, 512
        $region60: #{tpu_custom_call.1} parent=51 // pred_fallthru
          _
        // Predicated region
        $region61: #{tpu_custom_call.1} parent=51 // pred_check
          %p354 = pneg %p97
        $region62: #{tpu_custom_call.1} parent=51 // pred_check_branch
          %356 = sbr.rel (%p354) target = $region64
        $region63: #{tpu_custom_call.1} parent=51 // pred_region
          %357 = dma.done [#allocation6], 512
        $region64: #{tpu_custom_call.1} parent=51 // pred_fallthru
          _
        // Predicated region
        $region65: #{tpu_custom_call.1} parent=51 // pred_check
          %p358 = pneg %p139
        $region66: #{tpu_custom_call.1} parent=51 // pred_check_branch
          %360 = sbr.rel (%p358) target = $region68
        $region67: #{tpu_custom_call.1} parent=51 // pred_region
          %361 = dma.done [#allocation9], 2048
        $region68: #{tpu_custom_call.1} parent=51 // pred_fallthru
          _
        %s362 = sand.u32 %s37, 1
        %s363 = scalar_lea.sflag [#allocation3], %s362
        %s364 = sand.u32 %s37, 1
        %s365 = smul.addr %s364, 32
        %s366 = scalar_lea.vmem [#allocation2], %s365
        %p367 = pneg %p50
        %p368 = pneg %p47
        %s369 = sand.u32 %s29, 1
        %s370 = scalar_lea.sflag [#allocation6], %s369
        %s371 = sand.u32 %s63, 1
        %s372 = smul.addr %s371, 32
        %s373 = scalar_lea.vmem [#allocation5], %s372
        %p374 = pneg %p76
        %p375 = pneg %p73
        %p376 = pneg %p97
        %p377 = pneg %p94
        %p378 = pneg %p118
        %p379 = pneg %p115
        %p380 = pneg %p139
        %p381 = pneg %p136
        %p382 = pneg %p160
        %p383 = pneg %p157
        %p384 = pneg %p181
        %p385 = pneg %p178
        %p386 = pneg %p202
        %p387 = pneg %p199
        %p388 = pneg %p228
        %p389 = pneg %p225
        %s390 = sand.u32 %s215, 1
        %s391 = scalar_lea.sflag [#allocation4], %s390
        %s392 = sand.u32 %s215, 1
        %s393 = smul.addr %s392, 16
        %s394 = scalar_lea.vmem [#allocation10], %s393
        %s395 = smul.u32 2, %s29
        %s396 = smul.u32 2, %s29
        %v397 = vld [vmem:[%s349] sm:$0xff]
        %v398 = vld [vmem:[%s349 + $0x8] sm:$0xff]
        %v399 = vld [vmem:[%s349 + $0x10] sm:$0xff]
        %v400 = vld [vmem:[%s349 + $0x18] sm:$0xff]
        %v401 = vld [vmem:[#allocation7] sm:$0xff]
        %v402 = vld [vmem:[#allocation7 + $0x8] sm:$0xff]
        %v403 = vld [vmem:[#allocation7 + $0x10] sm:$0xff]
        %v404 = vld [vmem:[#allocation7 + $0x18] sm:$0xff]
        %v405 = vld [vmem:[%s3] sm:$0x1]
        %v407 = vlaneseq
        %v408 = vshrl.u32 %v407, 7
        %v409 = vsub.s32 0, %v408
        %v410 = vrot.slane %v405, %v409
        %vm412 = vcmask 261120
        %v414 = vsel %vm412, %v397, 0
        %v417 = vsel %vm412, %v398, 0
        %v420 = vsel %vm412, %v399, 0
        %v423 = vsel %vm412, %v400, 0
        %425 = vmatprep.subr.mxu0 0.0
        %426 = vmatpush1.msra.mxu0 %v401
        %427 = vmatprep.subr.mxu0 0.0
        %428 = vmatpush1.msra.mxu0 %v402
        %429 = vmatprep.subr.mxu0 0.0
        %430 = vmatpush1.msra.mxu0 %v403
        %431 = vmatprep.subr.mxu0 0.0
        %432 = vmatpush1.msra.mxu0 %v404
        %433 = vmatprep.subr.mxu0 0.0
        %434 = vmatpush1.msra.mxu0 0.0
        %435 = vmatprep.subr.mxu0 0.0
        %436 = vmatpush1.msra.mxu0 0.0
        %437 = vmatprep.subr.mxu0 0.0
        %438 = vmatpush1.msra.mxu0 0.0
        %439 = vmatprep.subr.mxu0 0.0
        %440 = vmatpush1.msra.mxu0 0.0
        %441 = vmatprep.subr.mxu0 0.0
        %442 = vmatpush1.msra.mxu0 0.0
        %443 = vmatprep.subr.mxu0 0.0
        %444 = vmatpush1.msra.mxu0 0.0
        %445 = vmatprep.subr.mxu0 0.0
        %446 = vmatpush1.msra.mxu0 0.0
        %447 = vmatprep.subr.mxu0 0.0
        %448 = vmatpush1.msra.mxu0 0.0
        %449 = vmatprep.subr.mxu0 0.0
        %450 = vmatpush1.msra.mxu0 0.0
        %451 = vmatprep.subr.mxu0 0.0
        %452 = vmatpush1.msra.mxu0 0.0
        %453 = vmatprep.subr.mxu0 0.0
        %454 = vmatpush1.msra.mxu0 0.0
        %455 = vmatprep.subr.mxu0 0.0
        %456 = vmatpush1.msra.mxu0 0.0
        %457 = vmatprep.subr.mxu0 0.0
        %458 = vmatpush1.msra.mxu0 0.0
        %459 = vmatprep.subr.mxu0 0.0
        %460 = vmatpush1.msra.mxu0 0.0
        %461 = vmatprep.subr.mxu0 0.0
        %462 = vmatpush1.msra.mxu0 0.0
        %463 = vmatprep.subr.mxu0 0.0
        %464 = vmatpush1.msra.mxu0 0.0
        %465 = vmatprep.subr.mxu0 0.0
        %466 = vmatpush1.msra.mxu0 0.0
        %467 = vmatprep.subr.mxu0 0.0
        %468 = vmatpush1.msra.mxu0 0.0
        %469 = vmatprep.subr.mxu0 0.0
        %470 = vmatpush1.msra.mxu0 0.0
        %471 = vmatprep.subr.mxu0 0.0
        %472 = vmatpush1.msra.mxu0 0.0
        %473 = vmatprep.subr.mxu0 0.0
        %474 = vmatpush1.msra.mxu0 0.0
        %475 = vmatprep.subr.mxu0 0.0
        %476 = vmatpush1.msra.mxu0 0.0
        %477 = vmatprep.subr.mxu0 0.0
        %478 = vmatpush1.msra.mxu0 0.0
        %479 = vmatprep.subr.mxu0 0.0
        %480 = vmatpush1.msra.mxu0 0.0
        %481 = vmatprep.subr.mxu0 0.0
        %482 = vmatpush1.msra.mxu0 0.0
        %483 = vmatprep.subr.mxu0 0.0
        %484 = vmatpush1.msra.mxu0 0.0
        %485 = vmatprep.subr.mxu0 0.0
        %486 = vmatpush1.msra.mxu0 0.0
        %487 = vmatprep.subr.mxu0 0.0
        %488 = vmatpush1.msra.mxu0 0.0
        %489 = vmatprep.mubr.f32.mxu0 0.0
        %490 = vmatmul.mubr.f32.gmra.mrb[0].mxu0 %v414
        %v491 = vpop.f32.mrb[0].mxu0
        %v492 = vadd.f32 %v410, %v491
        %v493 = vpop.f32.mrb[0].mxu0
        %494 = vmatprep.mubr.f32.mxu0 0.0
        %495 = vmatmul.mubr.f32.gmra.mrb[0].mxu0 %v417
        %v496 = vpop.f32.mrb[0].mxu0
        %v497 = vadd.f32 %v410, %v496
        %v498 = vpop.f32.mrb[0].mxu0
        %499 = vmatprep.mubr.f32.mxu0 0.0
        %500 = vmatmul.mubr.f32.gmra.mrb[0].mxu0 %v420
        %v501 = vpop.f32.mrb[0].mxu0
        %v502 = vadd.f32 %v410, %v501
        %v503 = vpop.f32.mrb[0].mxu0
        %504 = vmatprep.mubr.f32.mxu0 0.0
        %505 = vmatmul.mubr.f32.gmra.mrb[0].mxu0 %v423
        %v506 = vpop.f32.mrb[0].mxu0
        %v507 = vadd.f32 %v410, %v506
        %v508 = vpop.f32.mrb[0].mxu0
        %509 = vdwg.mxu0
        %v510 = vmax.f32 %v492, 0.0
        %v511 = vmax.f32 %v497, 0.0
        %v512 = vmax.f32 %v502, 0.0
        %v513 = vmax.f32 %v507, 0.0
        %v514 = vld [vmem:[#allocation8] sm:$0xff]
        %v515 = vld [vmem:[#allocation8 + $0x8] sm:$0xff]
        %v516 = vld [vmem:[#allocation8 + $0x10] sm:$0xff]
        %v517 = vld [vmem:[#allocation8 + $0x18] sm:$0xff]
        %v518 = vld [vmem:[#allocation8 + $0x20] sm:$0xff]
        %v519 = vld [vmem:[#allocation8 + $0x28] sm:$0xff]
        %v520 = vld [vmem:[#allocation8 + $0x30] sm:$0xff]
        %v521 = vld [vmem:[#allocation8 + $0x38] sm:$0xff]
        %v522 = vld [vmem:[#allocation8 + $0x40] sm:$0xff]
        %v523 = vld [vmem:[#allocation8 + $0x48] sm:$0xff]
        %v524 = vld [vmem:[#allocation8 + $0x50] sm:$0xff]
        %v525 = vld [vmem:[#allocation8 + $0x58] sm:$0xff]
        %v526 = vld [vmem:[#allocation8 + $0x60] sm:$0xff]
        %v527 = vld [vmem:[#allocation8 + $0x68] sm:$0xff]
        %v528 = vld [vmem:[#allocation8 + $0x70] sm:$0xff]
        %v529 = vld [vmem:[#allocation8 + $0x78] sm:$0xff]
        %v530 = vld [vmem:[%s5] sm:$0x1]
        %v532 = vlaneseq
        %v533 = vshrl.u32 %v532, 7
        %v534 = vsub.s32 0, %v533
        %v535 = vrot.slane %v530, %v534
        %537 = vmatprep.subr.mxu0 0.0
        %538 = vmatpush1.msra.mxu0 %v514
        %539 = vmatprep.subr.mxu0 0.0
        %540 = vmatpush1.msra.mxu0 %v515
        %541 = vmatprep.subr.mxu0 0.0
        %542 = vmatpush1.msra.mxu0 %v516
        %543 = vmatprep.subr.mxu0 0.0
        %544 = vmatpush1.msra.mxu0 %v517
        %545 = vmatprep.subr.mxu0 0.0
        %546 = vmatpush1.msra.mxu0 %v518
        %547 = vmatprep.subr.mxu0 0.0
        %548 = vmatpush1.msra.mxu0 %v519
        %549 = vmatprep.subr.mxu0 0.0
        %550 = vmatpush1.msra.mxu0 %v520
        %551 = vmatprep.subr.mxu0 0.0
        %552 = vmatpush1.msra.mxu0 %v521
        %553 = vmatprep.subr.mxu0 0.0
        %554 = vmatpush1.msra.mxu0 %v522
        %555 = vmatprep.subr.mxu0 0.0
        %556 = vmatpush1.msra.mxu0 %v523
        %557 = vmatprep.subr.mxu0 0.0
        %558 = vmatpush1.msra.mxu0 %v524
        %559 = vmatprep.subr.mxu0 0.0
        %560 = vmatpush1.msra.mxu0 %v525
        %561 = vmatprep.subr.mxu0 0.0
        %562 = vmatpush1.msra.mxu0 %v526
        %563 = vmatprep.subr.mxu0 0.0
        %564 = vmatpush1.msra.mxu0 %v527
        %565 = vmatprep.subr.mxu0 0.0
        %566 = vmatpush1.msra.mxu0 %v528
        %567 = vmatprep.subr.mxu0 0.0
        %568 = vmatpush1.msra.mxu0 %v529
        %569 = vmatprep.subr.mxu0 0.0
        %570 = vmatpush1.msra.mxu0 0.0
        %571 = vmatprep.subr.mxu0 0.0
        %572 = vmatpush1.msra.mxu0 0.0
        %573 = vmatprep.subr.mxu0 0.0
        %574 = vmatpush1.msra.mxu0 0.0
        %575 = vmatprep.subr.mxu0 0.0
        %576 = vmatpush1.msra.mxu0 0.0
        %577 = vmatprep.subr.mxu0 0.0
        %578 = vmatpush1.msra.mxu0 0.0
        %579 = vmatprep.subr.mxu0 0.0
        %580 = vmatpush1.msra.mxu0 0.0
        %581 = vmatprep.subr.mxu0 0.0
        %582 = vmatpush1.msra.mxu0 0.0
        %583 = vmatprep.subr.mxu0 0.0
        %584 = vmatpush1.msra.mxu0 0.0
        %585 = vmatprep.subr.mxu0 0.0
        %586 = vmatpush1.msra.mxu0 0.0
        %587 = vmatprep.subr.mxu0 0.0
        %588 = vmatpush1.msra.mxu0 0.0
        %589 = vmatprep.subr.mxu0 0.0
        %590 = vmatpush1.msra.mxu0 0.0
        %591 = vmatprep.subr.mxu0 0.0
        %592 = vmatpush1.msra.mxu0 0.0
        %593 = vmatprep.subr.mxu0 0.0
        %594 = vmatpush1.msra.mxu0 0.0
        %595 = vmatprep.subr.mxu0 0.0
        %596 = vmatpush1.msra.mxu0 0.0
        %597 = vmatprep.subr.mxu0 0.0
        %598 = vmatpush1.msra.mxu0 0.0
        %599 = vmatprep.subr.mxu0 0.0
        %600 = vmatpush1.msra.mxu0 0.0
        %601 = vmatprep.mubr.f32.mxu0 0.0
        %602 = vmatmul.mubr.f32.gmra.mrb[0].mxu0 %v510
        %v603 = vpop.f32.mrb[0].mxu0
        %v604 = vadd.f32 %v535, %v603
        %v605 = vpop.f32.mrb[0].mxu0
        %606 = vmatprep.mubr.f32.mxu0 0.0
        %607 = vmatmul.mubr.f32.gmra.mrb[0].mxu0 %v511
        %v608 = vpop.f32.mrb[0].mxu0
        %v609 = vadd.f32 %v535, %v608
        %v610 = vpop.f32.mrb[0].mxu0
        %611 = vmatprep.mubr.f32.mxu0 0.0
        %612 = vmatmul.mubr.f32.gmra.mrb[0].mxu0 %v512
        %v613 = vpop.f32.mrb[0].mxu0
        %v614 = vadd.f32 %v535, %v613
        %v615 = vpop.f32.mrb[0].mxu0
        %616 = vmatprep.mubr.f32.mxu0 0.0
        %617 = vmatmul.mubr.f32.gmra.mrb[0].mxu0 %v513
        %v618 = vpop.f32.mrb[0].mxu0
        %v619 = vadd.f32 %v535, %v618
        %v620 = vpop.f32.mrb[0].mxu0
        %621 = vdwg.mxu0
        %v622 = vlaneseq
        %v623 = vshrl.u32 %v622, 7
        %v624 = vadd.s32 %v623, 8
        %v625 = vlaneseq
        %v626 = vand.u32 %v625, 127
        %vm627 = vcmp.eq.s32.totalorder %v623, %v626
        %vm628 = vcmp.eq.s32.totalorder %v624, %v626
        %v629 = vsel %vm627, 1, 0
        %v630 = vsel %vm628, 1, 0
        %v631 = vcvt.s32.f32 %v629
        %v632 = vcvt.s32.f32 %v630
        %v633 = vld [vmem:[%s340] sm:$0xf]
        %v634 = vld [vmem:[%s340 + $0x4] sm:$0xf]
        %v635 = vunpack.c.l.bf16 %v633
        %v636 = vunpack.c.l.bf16 %v634
        %vm637 = vcmask 130048
        %v638 = vsel %vm637, %v635, 0.0
        %639 = vadd.xlane.f32.xlu0 %v638
        %v640 = vpop.xlane.xlu0 %639
        %v641 = vsel %vm637, %v636, 0.0
        %642 = vadd.xlane.f32.xlu0 %v641
        %v643 = vpop.xlane.xlu0 %642
        %v644 = vmax.f32 %v640, 1.0
        %v645 = vmax.f32 %v643, 1.0
        %v646 = vrcp.pop %v644
        %v647 = vmul.f32 1.0, %v646
        %v648 = vrcp.pop %v645
        %v649 = vmul.f32 1.0, %v648
        %v651 = vsel %vm637, %v635, 0
        %v654 = vsel %vm637, %v636, 0
        %656 = vmatprep.subr.mxu0 0.0
        %657 = vmatpush1.msra.mxu0 %v604
        %658 = vmatprep.subr.mxu0 0.0
        %659 = vmatpush1.msra.mxu0 %v609
        %660 = vmatprep.subr.mxu0 0.0
        %661 = vmatpush1.msra.mxu0 0.0
        %662 = vmatprep.subr.mxu0 0.0
        %663 = vmatpush1.msra.mxu0 0.0
        %664 = vmatprep.subr.mxu0 0.0
        %665 = vmatpush1.msra.mxu0 0.0
        %666 = vmatprep.subr.mxu0 0.0
        %667 = vmatpush1.msra.mxu0 0.0
        %668 = vmatprep.subr.mxu0 0.0
        %669 = vmatpush1.msra.mxu0 0.0
        %670 = vmatprep.subr.mxu0 0.0
        %671 = vmatpush1.msra.mxu0 0.0
        %672 = vmatprep.subr.mxu0 0.0
        %673 = vmatpush1.msra.mxu0 0.0
        %674 = vmatprep.subr.mxu0 0.0
        %675 = vmatpush1.msra.mxu0 0.0
        %676 = vmatprep.subr.mxu0 0.0
        %677 = vmatpush1.msra.mxu0 0.0
        %678 = vmatprep.subr.mxu0 0.0
        %679 = vmatpush1.msra.mxu0 0.0
        %680 = vmatprep.subr.mxu0 0.0
        %681 = vmatpush1.msra.mxu0 0.0
        %682 = vmatprep.subr.mxu0 0.0
        %683 = vmatpush1.msra.mxu0 0.0
        %684 = vmatprep.subr.mxu0 0.0
        %685 = vmatpush1.msra.mxu0 0.0
        %686 = vmatprep.subr.mxu0 0.0
        %687 = vmatpush1.msra.mxu0 0.0
        %688 = vmatprep.subr.mxu0 0.0
        %689 = vmatpush1.msra.mxu0 0.0
        %690 = vmatprep.subr.mxu0 0.0
        %691 = vmatpush1.msra.mxu0 0.0
        %692 = vmatprep.subr.mxu0 0.0
        %693 = vmatpush1.msra.mxu0 0.0
        %694 = vmatprep.subr.mxu0 0.0
        %695 = vmatpush1.msra.mxu0 0.0
        %696 = vmatprep.subr.mxu0 0.0
        %697 = vmatpush1.msra.mxu0 0.0
        %698 = vmatprep.subr.mxu0 0.0
        %699 = vmatpush1.msra.mxu0 0.0
        %700 = vmatprep.subr.mxu0 0.0
        %701 = vmatpush1.msra.mxu0 0.0
        %702 = vmatprep.subr.mxu0 0.0
        %703 = vmatpush1.msra.mxu0 0.0
        %704 = vmatprep.subr.mxu0 0.0
        %705 = vmatpush1.msra.mxu0 0.0
        %706 = vmatprep.subr.mxu0 0.0
        %707 = vmatpush1.msra.mxu0 0.0
        %708 = vmatprep.subr.mxu0 0.0
        %709 = vmatpush1.msra.mxu0 0.0
        %710 = vmatprep.subr.mxu0 0.0
        %711 = vmatpush1.msra.mxu0 0.0
        %712 = vmatprep.subr.mxu0 0.0
        %713 = vmatpush1.msra.mxu0 0.0
        %714 = vmatprep.subr.mxu0 0.0
        %715 = vmatpush1.msra.mxu0 0.0
        %716 = vmatprep.subr.mxu0 0.0
        %717 = vmatpush1.msra.mxu0 0.0
        %718 = vmatprep.subr.mxu0 0.0
        %719 = vmatpush1.msra.mxu0 0.0
        %720 = vmatprep.mubr.f32.mxu0 0.0
        %721 = vmatmul.mubr.f32.gmra.mrb[0].mxu0 %v651
        %v722 = vpop.f32.mrb[0].mxu0
        %v723 = vadd.f32 0.0, %v722
        %v724 = vpop.f32.mrb[0].mxu0
        %725 = vmatprep.mubr.f32.mxu0 0.0
        %726 = vmatmul.mubr.f32.gmra.mrb[0].mxu0 %v654
        %v727 = vpop.f32.mrb[0].mxu0
        %v728 = vadd.f32 0.0, %v727
        %v729 = vpop.f32.mrb[0].mxu0
        %730 = vdwg.mxu0
        %v731 = vmul.f32 %v723, %v647
        %v732 = vmul.f32 %v728, %v649
        %v733 = vmul.f32 %v731, 0.01
        %v734 = vmul.f32 %v732, 0.01
        %v735 = vmax.f32 %v731, %v733
        %v736 = vmax.f32 %v732, %v734
        %v737 = vadd.f32 %v735, 0.0
        %v738 = vadd.f32 %v736, 0.0
        %739 = vmatprep.subr.mxu0 0.0
        %740 = vmatpush1.msra.mxu0 %v635
        %741 = vmatprep.subr.mxu0 0.0
        %742 = vmatpush1.msra.mxu0 %v636
        %743 = vmatprep.subr.mxu0 0.0
        %744 = vmatpush1.msra.mxu0 0.0
        %745 = vmatprep.subr.mxu0 0.0
        %746 = vmatpush1.msra.mxu0 0.0
        %747 = vmatprep.subr.mxu0 0.0
        %748 = vmatpush1.msra.mxu0 0.0
        %749 = vmatprep.subr.mxu0 0.0
        %750 = vmatpush1.msra.mxu0 0.0
        %751 = vmatprep.subr.mxu0 0.0
        %752 = vmatpush1.msra.mxu0 0.0
        %753 = vmatprep.subr.mxu0 0.0
        %754 = vmatpush1.msra.mxu0 0.0
        %755 = vmatprep.subr.mxu0 0.0
        %756 = vmatpush1.msra.mxu0 0.0
        %757 = vmatprep.subr.mxu0 0.0
        %758 = vmatpush1.msra.mxu0 0.0
        %759 = vmatprep.subr.mxu0 0.0
        %760 = vmatpush1.msra.mxu0 0.0
        %761 = vmatprep.subr.mxu0 0.0
        %762 = vmatpush1.msra.mxu0 0.0
        %763 = vmatprep.subr.mxu0 0.0
        %764 = vmatpush1.msra.mxu0 0.0
        %765 = vmatprep.subr.mxu0 0.0
        %766 = vmatpush1.msra.mxu0 0.0
        %767 = vmatprep.subr.mxu0 0.0
        %768 = vmatpush1.msra.mxu0 0.0
        %769 = vmatprep.subr.mxu0 0.0
        %770 = vmatpush1.msra.mxu0 0.0
        %771 = vmatprep.subr.mxu0 0.0
        %772 = vmatpush1.msra.mxu0 0.0
        %773 = vmatprep.subr.mxu0 0.0
        %774 = vmatpush1.msra.mxu0 0.0
        %775 = vmatprep.subr.mxu0 0.0
        %776 = vmatpush1.msra.mxu0 0.0
        %777 = vmatprep.subr.mxu0 0.0
        %778 = vmatpush1.msra.mxu0 0.0
        %779 = vmatprep.subr.mxu0 0.0
        %780 = vmatpush1.msra.mxu0 0.0
        %781 = vmatprep.subr.mxu0 0.0
        %782 = vmatpush1.msra.mxu0 0.0
        %783 = vmatprep.subr.mxu0 0.0
        %784 = vmatpush1.msra.mxu0 0.0
        %785 = vmatprep.subr.mxu0 0.0
        %786 = vmatpush1.msra.mxu0 0.0
        %787 = vmatprep.subr.mxu0 0.0
        %788 = vmatpush1.msra.mxu0 0.0
        %789 = vmatprep.subr.mxu0 0.0
        %790 = vmatpush1.msra.mxu0 0.0
        %791 = vmatprep.subr.mxu0 0.0
        %792 = vmatpush1.msra.mxu0 0.0
        %793 = vmatprep.subr.mxu0 0.0
        %794 = vmatpush1.msra.mxu0 0.0
        %795 = vmatprep.subr.mxu0 0.0
        %796 = vmatpush1.msra.mxu0 0.0
        %797 = vmatprep.subr.mxu0 0.0
        %798 = vmatpush1.msra.mxu0 0.0
        %799 = vmatprep.subr.mxu0 0.0
        %800 = vmatpush1.msra.mxu0 0.0
        %801 = vmatprep.subr.mxu0 0.0
        %802 = vmatpush1.msra.mxu0 0.0
        %803 = vmatprep.mubr.f32.mxu0 0.0
        %804 = vmatmul.mubr.f32.gmra.mrb[0].mxu0 %v651
        %v805 = vpop.f32.mrb[0].mxu0
        %v806 = vadd.f32 0.0, %v805
        %v807 = vpop.f32.mrb[0].mxu0
        %808 = vmatprep.mubr.f32.mxu0 0.0
        %809 = vmatmul.mubr.f32.gmra.mrb[0].mxu0 %v654
        %v810 = vpop.f32.mrb[0].mxu0
        %v811 = vadd.f32 0.0, %v810
        %v812 = vpop.f32.mrb[0].mxu0
        %813 = vdwg.mxu0
        %v814 = vmul.f32 %v806, %v631
        %v815 = vmul.f32 %v811, %v632
        %v816 = vsel %vm637, %v814, 0.0
        %817 = vadd.xlane.f32.xlu0 %v816
        %v818 = vpop.xlane.xlu0 %817
        %v819 = vsel %vm637, %v815, 0.0
        %820 = vadd.xlane.f32.xlu0 %v819
        %v821 = vpop.xlane.xlu0 %820
        %v822 = vmul.f32 %v818, %v604
        %v823 = vmul.f32 %v821, %v609
        %v824 = vmul.f32 %v822, %v647
        %v825 = vmul.f32 %v823, %v649
        %v826 = vmul.f32 %v824, 0.01
        %v827 = vmul.f32 %v825, 0.01
        %v828 = vmax.f32 %v824, %v826
        %v829 = vmax.f32 %v825, %v827
        %832 = vrot.lane.b32.xlu0 %v828, 64
        %v833 = vpop.permute.xlu0 %832
        %834 = vrot.lane.b32.xlu0 %v829, 64
        %v835 = vpop.permute.xlu0 %834
        %v838 = vadd.f32 %v737, %v833
        %v839 = vadd.f32 %v738, %v835
        %s840 = scalar_lea.vmem %s340, 8 [#allocation2]
        %v841 = vld [vmem:[%s840] sm:$0xf]
        %v842 = vld [vmem:[%s840 + $0x4] sm:$0xf]
        %v843 = vunpack.c.l.bf16 %v841
        %v844 = vunpack.c.l.bf16 %v842
        %v845 = vsel %vm637, %v843, 0.0
        %846 = vadd.xlane.f32.xlu0 %v845
        %v847 = vpop.xlane.xlu0 %846
        %v848 = vsel %vm637, %v844, 0.0
        %849 = vadd.xlane.f32.xlu0 %v848
        %v850 = vpop.xlane.xlu0 %849
        %v851 = vmax.f32 %v847, 1.0
        %v852 = vmax.f32 %v850, 1.0
        %v853 = vrcp.pop %v851
        %v854 = vmul.f32 1.0, %v853
        %v855 = vrcp.pop %v852
        %v856 = vmul.f32 1.0, %v855
        %859 = vrot.lane.b32.xlu0 %v604, 96
        %v860 = vpop.permute.xlu0 %859
        %861 = vrot.lane.b32.xlu0 %v609, 96
        %v862 = vpop.permute.xlu0 %861
        %v866 = vsel %vm637, %v843, 0
        %v869 = vsel %vm637, %v844, 0
        %871 = vmatprep.subr.mxu0 0.0
        %872 = vmatpush1.msra.mxu0 %v860
        %873 = vmatprep.subr.mxu0 0.0
        %874 = vmatpush1.msra.mxu0 %v862
        %875 = vmatprep.subr.mxu0 0.0
        %876 = vmatpush1.msra.mxu0 0.0
        %877 = vmatprep.subr.mxu0 0.0
        %878 = vmatpush1.msra.mxu0 0.0
        %879 = vmatprep.subr.mxu0 0.0
        %880 = vmatpush1.msra.mxu0 0.0
        %881 = vmatprep.subr.mxu0 0.0
        %882 = vmatpush1.msra.mxu0 0.0
        %883 = vmatprep.subr.mxu0 0.0
        %884 = vmatpush1.msra.mxu0 0.0
        %885 = vmatprep.subr.mxu0 0.0
        %886 = vmatpush1.msra.mxu0 0.0
        %887 = vmatprep.subr.mxu0 0.0
        %888 = vmatpush1.msra.mxu0 0.0
        %889 = vmatprep.subr.mxu0 0.0
        %890 = vmatpush1.msra.mxu0 0.0
        %891 = vmatprep.subr.mxu0 0.0
        %892 = vmatpush1.msra.mxu0 0.0
        %893 = vmatprep.subr.mxu0 0.0
        %894 = vmatpush1.msra.mxu0 0.0
        %895 = vmatprep.subr.mxu0 0.0
        %896 = vmatpush1.msra.mxu0 0.0
        %897 = vmatprep.subr.mxu0 0.0
        %898 = vmatpush1.msra.mxu0 0.0
        %899 = vmatprep.subr.mxu0 0.0
        %900 = vmatpush1.msra.mxu0 0.0
        %901 = vmatprep.subr.mxu0 0.0
        %902 = vmatpush1.msra.mxu0 0.0
        %903 = vmatprep.subr.mxu0 0.0
        %904 = vmatpush1.msra.mxu0 0.0
        %905 = vmatprep.subr.mxu0 0.0
        %906 = vmatpush1.msra.mxu0 0.0
        %907 = vmatprep.subr.mxu0 0.0
        %908 = vmatpush1.msra.mxu0 0.0
        %909 = vmatprep.subr.mxu0 0.0
        %910 = vmatpush1.msra.mxu0 0.0
        %911 = vmatprep.subr.mxu0 0.0
        %912 = vmatpush1.msra.mxu0 0.0
        %913 = vmatprep.subr.mxu0 0.0
        %914 = vmatpush1.msra.mxu0 0.0
        %915 = vmatprep.subr.mxu0 0.0
        %916 = vmatpush1.msra.mxu0 0.0
        %917 = vmatprep.subr.mxu0 0.0
        %918 = vmatpush1.msra.mxu0 0.0
        %919 = vmatprep.subr.mxu0 0.0
        %920 = vmatpush1.msra.mxu0 0.0
        %921 = vmatprep.subr.mxu0 0.0
        %922 = vmatpush1.msra.mxu0 0.0
        %923 = vmatprep.subr.mxu0 0.0
        %924 = vmatpush1.msra.mxu0 0.0
        %925 = vmatprep.subr.mxu0 0.0
        %926 = vmatpush1.msra.mxu0 0.0
        %927 = vmatprep.subr.mxu0 0.0
        %928 = vmatpush1.msra.mxu0 0.0
        %929 = vmatprep.subr.mxu0 0.0
        %930 = vmatpush1.msra.mxu0 0.0
        %931 = vmatprep.subr.mxu0 0.0
        %932 = vmatpush1.msra.mxu0 0.0
        %933 = vmatprep.subr.mxu0 0.0
        %934 = vmatpush1.msra.mxu0 0.0
        %935 = vmatprep.mubr.f32.mxu0 0.0
        %936 = vmatmul.mubr.f32.gmra.mrb[0].mxu0 %v866
        %v937 = vpop.f32.mrb[0].mxu0
        %v938 = vadd.f32 0.0, %v937
        %v939 = vpop.f32.mrb[0].mxu0
        %940 = vmatprep.mubr.f32.mxu0 0.0
        %941 = vmatmul.mubr.f32.gmra.mrb[0].mxu0 %v869
        %v942 = vpop.f32.mrb[0].mxu0
        %v943 = vadd.f32 0.0, %v942
        %v944 = vpop.f32.mrb[0].mxu0
        %945 = vdwg.mxu0
        %v946 = vmul.f32 %v938, %v854
        %v947 = vmul.f32 %v943, %v856
        %v948 = vmul.f32 %v946, 0.01
        %v949 = vmul.f32 %v947, 0.01
        %v950 = vmax.f32 %v946, %v948
        %v951 = vmax.f32 %v947, %v949
        %v952 = vadd.f32 %v838, %v950
        %v953 = vadd.f32 %v839, %v951
        %954 = vmatprep.subr.mxu0 0.0
        %955 = vmatpush1.msra.mxu0 %v843
        %956 = vmatprep.subr.mxu0 0.0
        %957 = vmatpush1.msra.mxu0 %v844
        %958 = vmatprep.subr.mxu0 0.0
        %959 = vmatpush1.msra.mxu0 0.0
        %960 = vmatprep.subr.mxu0 0.0
        %961 = vmatpush1.msra.mxu0 0.0
        %962 = vmatprep.subr.mxu0 0.0
        %963 = vmatpush1.msra.mxu0 0.0
        %964 = vmatprep.subr.mxu0 0.0
        %965 = vmatpush1.msra.mxu0 0.0
        %966 = vmatprep.subr.mxu0 0.0
        %967 = vmatpush1.msra.mxu0 0.0
        %968 = vmatprep.subr.mxu0 0.0
        %969 = vmatpush1.msra.mxu0 0.0
        %970 = vmatprep.subr.mxu0 0.0
        %971 = vmatpush1.msra.mxu0 0.0
        %972 = vmatprep.subr.mxu0 0.0
        %973 = vmatpush1.msra.mxu0 0.0
        %974 = vmatprep.subr.mxu0 0.0
        %975 = vmatpush1.msra.mxu0 0.0
        %976 = vmatprep.subr.mxu0 0.0
        %977 = vmatpush1.msra.mxu0 0.0
        %978 = vmatprep.subr.mxu0 0.0
        %979 = vmatpush1.msra.mxu0 0.0
        %980 = vmatprep.subr.mxu0 0.0
        %981 = vmatpush1.msra.mxu0 0.0
        %982 = vmatprep.subr.mxu0 0.0
        %983 = vmatpush1.msra.mxu0 0.0
        %984 = vmatprep.subr.mxu0 0.0
        %985 = vmatpush1.msra.mxu0 0.0
        %986 = vmatprep.subr.mxu0 0.0
        %987 = vmatpush1.msra.mxu0 0.0
        %988 = vmatprep.subr.mxu0 0.0
        %989 = vmatpush1.msra.mxu0 0.0
        %990 = vmatprep.subr.mxu0 0.0
        %991 = vmatpush1.msra.mxu0 0.0
        %992 = vmatprep.subr.mxu0 0.0
        %993 = vmatpush1.msra.mxu0 0.0
        %994 = vmatprep.subr.mxu0 0.0
        %995 = vmatpush1.msra.mxu0 0.0
        %996 = vmatprep.subr.mxu0 0.0
        %997 = vmatpush1.msra.mxu0 0.0
        %998 = vmatprep.subr.mxu0 0.0
        %999 = vmatpush1.msra.mxu0 0.0
        %1000 = vmatprep.subr.mxu0 0.0
        %1001 = vmatpush1.msra.mxu0 0.0
        %1002 = vmatprep.subr.mxu0 0.0
        %1003 = vmatpush1.msra.mxu0 0.0
        %1004 = vmatprep.subr.mxu0 0.0
        %1005 = vmatpush1.msra.mxu0 0.0
        %1006 = vmatprep.subr.mxu0 0.0
        %1007 = vmatpush1.msra.mxu0 0.0
        %1008 = vmatprep.subr.mxu0 0.0
        %1009 = vmatpush1.msra.mxu0 0.0
        %1010 = vmatprep.subr.mxu0 0.0
        %1011 = vmatpush1.msra.mxu0 0.0
        %1012 = vmatprep.subr.mxu0 0.0
        %1013 = vmatpush1.msra.mxu0 0.0
        %1014 = vmatprep.subr.mxu0 0.0
        %1015 = vmatpush1.msra.mxu0 0.0
        %1016 = vmatprep.subr.mxu0 0.0
        %1017 = vmatpush1.msra.mxu0 0.0
        %1018 = vmatprep.mubr.f32.mxu0 0.0
        %1019 = vmatmul.mubr.f32.gmra.mrb[0].mxu0 %v866
        %v1020 = vpop.f32.mrb[0].mxu0
        %v1021 = vadd.f32 0.0, %v1020
        %v1022 = vpop.f32.mrb[0].mxu0
        %1023 = vmatprep.mubr.f32.mxu0 0.0
        %1024 = vmatmul.mubr.f32.gmra.mrb[0].mxu0 %v869
        %v1025 = vpop.f32.mrb[0].mxu0
        %v1026 = vadd.f32 0.0, %v1025
        %v1027 = vpop.f32.mrb[0].mxu0
        %1028 = vdwg.mxu0
        %v1029 = vmul.f32 %v1021, %v631
        %v1030 = vmul.f32 %v1026, %v632
        %v1031 = vsel %vm637, %v1029, 0.0
        %1032 = vadd.xlane.f32.xlu0 %v1031
        %v1033 = vpop.xlane.xlu0 %1032
        %v1034 = vsel %vm637, %v1030, 0.0
        %1035 = vadd.xlane.f32.xlu0 %v1034
        %v1036 = vpop.xlane.xlu0 %1035
        %v1037 = vmul.f32 %v1033, %v604
        %v1038 = vmul.f32 %v1036, %v609
        %v1039 = vmul.f32 %v1037, %v854
        %v1040 = vmul.f32 %v1038, %v856
        %v1041 = vmul.f32 %v1039, 0.01
        %v1042 = vmul.f32 %v1040, 0.01
        %v1043 = vmax.f32 %v1039, %v1041
        %v1044 = vmax.f32 %v1040, %v1042
        %1047 = vrot.lane.b32.xlu0 %v1043, 32
        %v1048 = vpop.permute.xlu0 %1047
        %1049 = vrot.lane.b32.xlu0 %v1044, 32
        %v1050 = vpop.permute.xlu0 %1049
        %v1053 = vadd.f32 %v952, %v1048
        %v1054 = vadd.f32 %v953, %v1050
        %v1055 = vmax.f32 %v1053, 0.0
        %v1056 = vmax.f32 %v1054, 0.0
        %v1057 = vsel %vm412, %v1055, 0.0
        %1058 = vadd.xlane.f32.xlu0 %v1057
        %v1059 = vpop.xlane.xlu0 %1058
        %v1060 = vsel %vm412, %v1056, 0.0
        %1061 = vadd.xlane.f32.xlu0 %v1060
        %v1062 = vpop.xlane.xlu0 %1061
        %v1063 = vrcp.pop 32.0
        %v1064 = vmul.f32 %v1059, %v1063
        %v1065 = vmul.f32 %v1062, %v1063
        %v1066 = vsub.f32 %v1055, %v1064
        %v1067 = vsub.f32 %v1056, %v1065
        %v1068 = vmul.f32 %v1066, %v1066
        %v1069 = vmul.f32 %v1067, %v1067
        %v1070 = vsel %vm412, %v1068, 0.0
        %1071 = vadd.xlane.f32.xlu0 %v1070
        %v1072 = vpop.xlane.xlu0 %1071
        %v1073 = vsel %vm412, %v1069, 0.0
        %1074 = vadd.xlane.f32.xlu0 %v1073
        %v1075 = vpop.xlane.xlu0 %1074
        %v1076 = vmul.f32 %v1072, %v1063
        %v1077 = vmul.f32 %v1075, %v1063
        %v1078 = vadd.f32 %v1076, 1e-05
        %v1079 = vadd.f32 %v1077, 1e-05
        %v1080 = vrsqrt.pop %v1078
        %v1081 = vrsqrt.pop %v1079
        %v1082 = vmul.f32 %v1066, %v1080
        %v1083 = vmul.f32 %v1067, %v1081
        %v1084 = vld [vmem:[%s6] sm:$0x1]
        %v1086 = vlaneseq
        %v1087 = vshrl.u32 %v1086, 7
        %v1088 = vsub.s32 0, %v1087
        %v1089 = vrot.slane %v1084, %v1088
        %v1091 = vmul.f32 %v1082, %v1089
        %v1092 = vmul.f32 %v1083, %v1089
        %v1093 = vld [vmem:[%s7] sm:$0x1]
        %v1095 = vlaneseq
        %v1096 = vshrl.u32 %v1095, 7
        %v1097 = vsub.s32 0, %v1096
        %v1098 = vrot.slane %v1093, %v1097
        %v1100 = vadd.f32 %v1091, %v1098
        %v1101 = vadd.f32 %v1092, %v1098
        %s1102 = scalar_lea.vmem %s340, 16 [#allocation2]
        %v1103 = vld [vmem:[%s1102] sm:$0xf]
        %v1104 = vld [vmem:[%s1102 + $0x4] sm:$0xf]
        %v1105 = vunpack.c.l.bf16 %v1103
        %v1106 = vunpack.c.l.bf16 %v1104
        %v1107 = vsel %vm637, %v1105, 0.0
        %1108 = vadd.xlane.f32.xlu0 %v1107
        %v1109 = vpop.xlane.xlu0 %1108
        %v1110 = vsel %vm637, %v1106, 0.0
        %1111 = vadd.xlane.f32.xlu0 %v1110
        %v1112 = vpop.xlane.xlu0 %1111
        %v1113 = vmax.f32 %v1109, 1.0
        %v1114 = vmax.f32 %v1112, 1.0
        %v1115 = vrcp.pop %v1113
        %v1116 = vmul.f32 1.0, %v1115
        %v1117 = vrcp.pop %v1114
        %v1118 = vmul.f32 1.0, %v1117
        %v1120 = vsel %vm637, %v1105, 0
        %v1123 = vsel %vm637, %v1106, 0
        %1125 = vmatprep.subr.mxu0 0.0
        %1126 = vmatpush1.msra.mxu0 %v614
        %1127 = vmatprep.subr.mxu0 0.0
        %1128 = vmatpush1.msra.mxu0 %v619
        %1129 = vmatprep.subr.mxu0 0.0
        %1130 = vmatpush1.msra.mxu0 0.0
        %1131 = vmatprep.subr.mxu0 0.0
        %1132 = vmatpush1.msra.mxu0 0.0
        %1133 = vmatprep.subr.mxu0 0.0
        %1134 = vmatpush1.msra.mxu0 0.0
        %1135 = vmatprep.subr.mxu0 0.0
        %1136 = vmatpush1.msra.mxu0 0.0
        %1137 = vmatprep.subr.mxu0 0.0
        %1138 = vmatpush1.msra.mxu0 0.0
        %1139 = vmatprep.subr.mxu0 0.0
        %1140 = vmatpush1.msra.mxu0 0.0
        %1141 = vmatprep.subr.mxu0 0.0
        %1142 = vmatpush1.msra.mxu0 0.0
        %1143 = vmatprep.subr.mxu0 0.0
        %1144 = vmatpush1.msra.mxu0 0.0
        %1145 = vmatprep.subr.mxu0 0.0
        %1146 = vmatpush1.msra.mxu0 0.0
        %1147 = vmatprep.subr.mxu0 0.0
        %1148 = vmatpush1.msra.mxu0 0.0
        %1149 = vmatprep.subr.mxu0 0.0
        %1150 = vmatpush1.msra.mxu0 0.0
        %1151 = vmatprep.subr.mxu0 0.0
        %1152 = vmatpush1.msra.mxu0 0.0
        %1153 = vmatprep.subr.mxu0 0.0
        %1154 = vmatpush1.msra.mxu0 0.0
        %1155 = vmatprep.subr.mxu0 0.0
        %1156 = vmatpush1.msra.mxu0 0.0
        %1157 = vmatprep.subr.mxu0 0.0
        %1158 = vmatpush1.msra.mxu0 0.0
        %1159 = vmatprep.subr.mxu0 0.0
        %1160 = vmatpush1.msra.mxu0 0.0
        %1161 = vmatprep.subr.mxu0 0.0
        %1162 = vmatpush1.msra.mxu0 0.0
        %1163 = vmatprep.subr.mxu0 0.0
        %1164 = vmatpush1.msra.mxu0 0.0
        %1165 = vmatprep.subr.mxu0 0.0
        %1166 = vmatpush1.msra.mxu0 0.0
        %1167 = vmatprep.subr.mxu0 0.0
        %1168 = vmatpush1.msra.mxu0 0.0
        %1169 = vmatprep.subr.mxu0 0.0
        %1170 = vmatpush1.msra.mxu0 0.0
        %1171 = vmatprep.subr.mxu0 0.0
        %1172 = vmatpush1.msra.mxu0 0.0
        %1173 = vmatprep.subr.mxu0 0.0
        %1174 = vmatpush1.msra.mxu0 0.0
        %1175 = vmatprep.subr.mxu0 0.0
        %1176 = vmatpush1.msra.mxu0 0.0
        %1177 = vmatprep.subr.mxu0 0.0
        %1178 = vmatpush1.msra.mxu0 0.0
        %1179 = vmatprep.subr.mxu0 0.0
        %1180 = vmatpush1.msra.mxu0 0.0
        %1181 = vmatprep.subr.mxu0 0.0
        %1182 = vmatpush1.msra.mxu0 0.0
        %1183 = vmatprep.subr.mxu0 0.0
        %1184 = vmatpush1.msra.mxu0 0.0
        %1185 = vmatprep.subr.mxu0 0.0
        %1186 = vmatpush1.msra.mxu0 0.0
        %1187 = vmatprep.subr.mxu0 0.0
        %1188 = vmatpush1.msra.mxu0 0.0
        %1189 = vmatprep.mubr.f32.mxu0 0.0
        %1190 = vmatmul.mubr.f32.gmra.mrb[0].mxu0 %v1120
        %v1191 = vpop.f32.mrb[0].mxu0
        %v1192 = vadd.f32 0.0, %v1191
        %v1193 = vpop.f32.mrb[0].mxu0
        %1194 = vmatprep.mubr.f32.mxu0 0.0
        %1195 = vmatmul.mubr.f32.gmra.mrb[0].mxu0 %v1123
        %v1196 = vpop.f32.mrb[0].mxu0
        %v1197 = vadd.f32 0.0, %v1196
        %v1198 = vpop.f32.mrb[0].mxu0
        %1199 = vdwg.mxu0
        %v1200 = vmul.f32 %v1192, %v1116
        %v1201 = vmul.f32 %v1197, %v1118
        %v1202 = vmul.f32 %v1200, 0.01
        %v1203 = vmul.f32 %v1201, 0.01
        %v1204 = vmax.f32 %v1200, %v1202
        %v1205 = vmax.f32 %v1201, %v1203
        %v1206 = vadd.f32 %v1204, 0.0
        %v1207 = vadd.f32 %v1205, 0.0
        %1208 = vmatprep.subr.mxu0 0.0
        %1209 = vmatpush1.msra.mxu0 %v1105
        %1210 = vmatprep.subr.mxu0 0.0
        %1211 = vmatpush1.msra.mxu0 %v1106
        %1212 = vmatprep.subr.mxu0 0.0
        %1213 = vmatpush1.msra.mxu0 0.0
        %1214 = vmatprep.subr.mxu0 0.0
        %1215 = vmatpush1.msra.mxu0 0.0
        %1216 = vmatprep.subr.mxu0 0.0
        %1217 = vmatpush1.msra.mxu0 0.0
        %1218 = vmatprep.subr.mxu0 0.0
        %1219 = vmatpush1.msra.mxu0 0.0
        %1220 = vmatprep.subr.mxu0 0.0
        %1221 = vmatpush1.msra.mxu0 0.0
        %1222 = vmatprep.subr.mxu0 0.0
        %1223 = vmatpush1.msra.mxu0 0.0
        %1224 = vmatprep.subr.mxu0 0.0
        %1225 = vmatpush1.msra.mxu0 0.0
        %1226 = vmatprep.subr.mxu0 0.0
        %1227 = vmatpush1.msra.mxu0 0.0
        %1228 = vmatprep.subr.mxu0 0.0
        %1229 = vmatpush1.msra.mxu0 0.0
        %1230 = vmatprep.subr.mxu0 0.0
        %1231 = vmatpush1.msra.mxu0 0.0
        %1232 = vmatprep.subr.mxu0 0.0
        %1233 = vmatpush1.msra.mxu0 0.0
        %1234 = vmatprep.subr.mxu0 0.0
        %1235 = vmatpush1.msra.mxu0 0.0
        %1236 = vmatprep.subr.mxu0 0.0
        %1237 = vmatpush1.msra.mxu0 0.0
        %1238 = vmatprep.subr.mxu0 0.0
        %1239 = vmatpush1.msra.mxu0 0.0
        %1240 = vmatprep.subr.mxu0 0.0
        %1241 = vmatpush1.msra.mxu0 0.0
        %1242 = vmatprep.subr.mxu0 0.0
        %1243 = vmatpush1.msra.mxu0 0.0
        %1244 = vmatprep.subr.mxu0 0.0
        %1245 = vmatpush1.msra.mxu0 0.0
        %1246 = vmatprep.subr.mxu0 0.0
        %1247 = vmatpush1.msra.mxu0 0.0
        %1248 = vmatprep.subr.mxu0 0.0
        %1249 = vmatpush1.msra.mxu0 0.0
        %1250 = vmatprep.subr.mxu0 0.0
        %1251 = vmatpush1.msra.mxu0 0.0
        %1252 = vmatprep.subr.mxu0 0.0
        %1253 = vmatpush1.msra.mxu0 0.0
        %1254 = vmatprep.subr.mxu0 0.0
        %1255 = vmatpush1.msra.mxu0 0.0
        %1256 = vmatprep.subr.mxu0 0.0
        %1257 = vmatpush1.msra.mxu0 0.0
        %1258 = vmatprep.subr.mxu0 0.0
        %1259 = vmatpush1.msra.mxu0 0.0
        %1260 = vmatprep.subr.mxu0 0.0
        %1261 = vmatpush1.msra.mxu0 0.0
        %1262 = vmatprep.subr.mxu0 0.0
        %1263 = vmatpush1.msra.mxu0 0.0
        %1264 = vmatprep.subr.mxu0 0.0
        %1265 = vmatpush1.msra.mxu0 0.0
        %1266 = vmatprep.subr.mxu0 0.0
        %1267 = vmatpush1.msra.mxu0 0.0
        %1268 = vmatprep.subr.mxu0 0.0
        %1269 = vmatpush1.msra.mxu0 0.0
        %1270 = vmatprep.subr.mxu0 0.0
        %1271 = vmatpush1.msra.mxu0 0.0
        %1272 = vmatprep.mubr.f32.mxu0 0.0
        %1273 = vmatmul.mubr.f32.gmra.mrb[0].mxu0 %v1120
        %v1274 = vpop.f32.mrb[0].mxu0
        %v1275 = vadd.f32 0.0, %v1274
        %v1276 = vpop.f32.mrb[0].mxu0
        %1277 = vmatprep.mubr.f32.mxu0 0.0
        %1278 = vmatmul.mubr.f32.gmra.mrb[0].mxu0 %v1123
        %v1279 = vpop.f32.mrb[0].mxu0
        %v1280 = vadd.f32 0.0, %v1279
        %v1281 = vpop.f32.mrb[0].mxu0
        %1282 = vdwg.mxu0
        %v1283 = vmul.f32 %v1275, %v631
        %v1284 = vmul.f32 %v1280, %v632
        %v1285 = vsel %vm637, %v1283, 0.0
        %1286 = vadd.xlane.f32.xlu0 %v1285
        %v1287 = vpop.xlane.xlu0 %1286
        %v1288 = vsel %vm637, %v1284, 0.0
        %1289 = vadd.xlane.f32.xlu0 %v1288
        %v1290 = vpop.xlane.xlu0 %1289
        %v1291 = vmul.f32 %v1287, %v614
        %v1292 = vmul.f32 %v1290, %v619
        %v1293 = vmul.f32 %v1291, %v1116
        %v1294 = vmul.f32 %v1292, %v1118
        %v1295 = vmul.f32 %v1293, 0.01
        %v1296 = vmul.f32 %v1294, 0.01
        %v1297 = vmax.f32 %v1293, %v1295
        %v1298 = vmax.f32 %v1294, %v1296
        %1301 = vrot.lane.b32.xlu0 %v1297, 64
        %v1302 = vpop.permute.xlu0 %1301
        %1303 = vrot.lane.b32.xlu0 %v1298, 64
        %v1304 = vpop.permute.xlu0 %1303
        %v1307 = vadd.f32 %v1206, %v1302
        %v1308 = vadd.f32 %v1207, %v1304
        %s1309 = scalar_lea.vmem %s340, 24 [#allocation2]
        %v1310 = vld [vmem:[%s1309] sm:$0xf]
        %v1311 = vld [vmem:[%s1309 + $0x4] sm:$0xf]
        %v1312 = vunpack.c.l.bf16 %v1310
        %v1313 = vunpack.c.l.bf16 %v1311
        %v1314 = vsel %vm637, %v1312, 0.0
        %1315 = vadd.xlane.f32.xlu0 %v1314
        %v1316 = vpop.xlane.xlu0 %1315
        %v1317 = vsel %vm637, %v1313, 0.0
        %1318 = vadd.xlane.f32.xlu0 %v1317
        %v1319 = vpop.xlane.xlu0 %1318
        %v1320 = vmax.f32 %v1316, 1.0
        %v1321 = vmax.f32 %v1319, 1.0
        %v1322 = vrcp.pop %v1320
        %v1323 = vmul.f32 1.0, %v1322
        %v1324 = vrcp.pop %v1321
        %v1325 = vmul.f32 1.0, %v1324
        %1328 = vrot.lane.b32.xlu0 %v614, 96
        %v1329 = vpop.permute.xlu0 %1328
        %1330 = vrot.lane.b32.xlu0 %v619, 96
        %v1331 = vpop.permute.xlu0 %1330
        %v1335 = vsel %vm637, %v1312, 0
        %v1338 = vsel %vm637, %v1313, 0
        %1340 = vmatprep.subr.mxu0 0.0
        %1341 = vmatpush1.msra.mxu0 %v1329
        %1342 = vmatprep.subr.mxu0 0.0
        %1343 = vmatpush1.msra.mxu0 %v1331
        %1344 = vmatprep.subr.mxu0 0.0
        %1345 = vmatpush1.msra.mxu0 0.0
        %1346 = vmatprep.subr.mxu0 0.0
        %1347 = vmatpush1.msra.mxu0 0.0
        %1348 = vmatprep.subr.mxu0 0.0
        %1349 = vmatpush1.msra.mxu0 0.0
        %1350 = vmatprep.subr.mxu0 0.0
        %1351 = vmatpush1.msra.mxu0 0.0
        %1352 = vmatprep.subr.mxu0 0.0
        %1353 = vmatpush1.msra.mxu0 0.0
        %1354 = vmatprep.subr.mxu0 0.0
        %1355 = vmatpush1.msra.mxu0 0.0
        %1356 = vmatprep.subr.mxu0 0.0
        %1357 = vmatpush1.msra.mxu0 0.0
        %1358 = vmatprep.subr.mxu0 0.0
        %1359 = vmatpush1.msra.mxu0 0.0
        %1360 = vmatprep.subr.mxu0 0.0
        %1361 = vmatpush1.msra.mxu0 0.0
        %1362 = vmatprep.subr.mxu0 0.0
        %1363 = vmatpush1.msra.mxu0 0.0
        %1364 = vmatprep.subr.mxu0 0.0
        %1365 = vmatpush1.msra.mxu0 0.0
        %1366 = vmatprep.subr.mxu0 0.0
        %1367 = vmatpush1.msra.mxu0 0.0
        %1368 = vmatprep.subr.mxu0 0.0
        %1369 = vmatpush1.msra.mxu0 0.0
        %1370 = vmatprep.subr.mxu0 0.0
        %1371 = vmatpush1.msra.mxu0 0.0
        %1372 = vmatprep.subr.mxu0 0.0
        %1373 = vmatpush1.msra.mxu0 0.0
        %1374 = vmatprep.subr.mxu0 0.0
        %1375 = vmatpush1.msra.mxu0 0.0
        %1376 = vmatprep.subr.mxu0 0.0
        %1377 = vmatpush1.msra.mxu0 0.0
        %1378 = vmatprep.subr.mxu0 0.0
        %1379 = vmatpush1.msra.mxu0 0.0
        %1380 = vmatprep.subr.mxu0 0.0
        %1381 = vmatpush1.msra.mxu0 0.0
        %1382 = vmatprep.subr.mxu0 0.0
        %1383 = vmatpush1.msra.mxu0 0.0
        %1384 = vmatprep.subr.mxu0 0.0
        %1385 = vmatpush1.msra.mxu0 0.0
        %1386 = vmatprep.subr.mxu0 0.0
        %1387 = vmatpush1.msra.mxu0 0.0
        %1388 = vmatprep.subr.mxu0 0.0
        %1389 = vmatpush1.msra.mxu0 0.0
        %1390 = vmatprep.subr.mxu0 0.0
        %1391 = vmatpush1.msra.mxu0 0.0
        %1392 = vmatprep.subr.mxu0 0.0
        %1393 = vmatpush1.msra.mxu0 0.0
        %1394 = vmatprep.subr.mxu0 0.0
        %1395 = vmatpush1.msra.mxu0 0.0
        %1396 = vmatprep.subr.mxu0 0.0
        %1397 = vmatpush1.msra.mxu0 0.0
        %1398 = vmatprep.subr.mxu0 0.0
        %1399 = vmatpush1.msra.mxu0 0.0
        %1400 = vmatprep.subr.mxu0 0.0
        %1401 = vmatpush1.msra.mxu0 0.0
        %1402 = vmatprep.subr.mxu0 0.0
        %1403 = vmatpush1.msra.mxu0 0.0
        %1404 = vmatprep.mubr.f32.mxu0 0.0
        %1405 = vmatmul.mubr.f32.gmra.mrb[0].mxu0 %v1335
        %v1406 = vpop.f32.mrb[0].mxu0
        %v1407 = vadd.f32 0.0, %v1406
        %v1408 = vpop.f32.mrb[0].mxu0
        %1409 = vmatprep.mubr.f32.mxu0 0.0
        %1410 = vmatmul.mubr.f32.gmra.mrb[0].mxu0 %v1338
        %v1411 = vpop.f32.mrb[0].mxu0
        %v1412 = vadd.f32 0.0, %v1411
        %v1413 = vpop.f32.mrb[0].mxu0
        %1414 = vdwg.mxu0
        %v1415 = vmul.f32 %v1407, %v1323
        %v1416 = vmul.f32 %v1412, %v1325
        %v1417 = vmul.f32 %v1415, 0.01
        %v1418 = vmul.f32 %v1416, 0.01
        %v1419 = vmax.f32 %v1415, %v1417
        %v1420 = vmax.f32 %v1416, %v1418
        %v1421 = vadd.f32 %v1307, %v1419
        %v1422 = vadd.f32 %v1308, %v1420
        %1423 = vmatprep.subr.mxu0 0.0
        %1424 = vmatpush1.msra.mxu0 %v1312
        %1425 = vmatprep.subr.mxu0 0.0
        %1426 = vmatpush1.msra.mxu0 %v1313
        %1427 = vmatprep.subr.mxu0 0.0
        %1428 = vmatpush1.msra.mxu0 0.0
        %1429 = vmatprep.subr.mxu0 0.0
        %1430 = vmatpush1.msra.mxu0 0.0
        %1431 = vmatprep.subr.mxu0 0.0
        %1432 = vmatpush1.msra.mxu0 0.0
        %1433 = vmatprep.subr.mxu0 0.0
        %1434 = vmatpush1.msra.mxu0 0.0
        %1435 = vmatprep.subr.mxu0 0.0
        %1436 = vmatpush1.msra.mxu0 0.0
        %1437 = vmatprep.subr.mxu0 0.0
        %1438 = vmatpush1.msra.mxu0 0.0
        %1439 = vmatprep.subr.mxu0 0.0
        %1440 = vmatpush1.msra.mxu0 0.0
        %1441 = vmatprep.subr.mxu0 0.0
        %1442 = vmatpush1.msra.mxu0 0.0
        %1443 = vmatprep.subr.mxu0 0.0
        %1444 = vmatpush1.msra.mxu0 0.0
        %1445 = vmatprep.subr.mxu0 0.0
        %1446 = vmatpush1.msra.mxu0 0.0
        %1447 = vmatprep.subr.mxu0 0.0
        %1448 = vmatpush1.msra.mxu0 0.0
        %1449 = vmatprep.subr.mxu0 0.0
        %1450 = vmatpush1.msra.mxu0 0.0
        %1451 = vmatprep.subr.mxu0 0.0
        %1452 = vmatpush1.msra.mxu0 0.0
        %1453 = vmatprep.subr.mxu0 0.0
        %1454 = vmatpush1.msra.mxu0 0.0
        %1455 = vmatprep.subr.mxu0 0.0
        %1456 = vmatpush1.msra.mxu0 0.0
        %1457 = vmatprep.subr.mxu0 0.0
        %1458 = vmatpush1.msra.mxu0 0.0
        %1459 = vmatprep.subr.mxu0 0.0
        %1460 = vmatpush1.msra.mxu0 0.0
        %1461 = vmatprep.subr.mxu0 0.0
        %1462 = vmatpush1.msra.mxu0 0.0
        %1463 = vmatprep.subr.mxu0 0.0
        %1464 = vmatpush1.msra.mxu0 0.0
        %1465 = vmatprep.subr.mxu0 0.0
        %1466 = vmatpush1.msra.mxu0 0.0
        %1467 = vmatprep.subr.mxu0 0.0
        %1468 = vmatpush1.msra.mxu0 0.0
        %1469 = vmatprep.subr.mxu0 0.0
        %1470 = vmatpush1.msra.mxu0 0.0
        %1471 = vmatprep.subr.mxu0 0.0
        %1472 = vmatpush1.msra.mxu0 0.0
        %1473 = vmatprep.subr.mxu0 0.0
        %1474 = vmatpush1.msra.mxu0 0.0
        %1475 = vmatprep.subr.mxu0 0.0
        %1476 = vmatpush1.msra.mxu0 0.0
        %1477 = vmatprep.subr.mxu0 0.0
        %1478 = vmatpush1.msra.mxu0 0.0
        %1479 = vmatprep.subr.mxu0 0.0
        %1480 = vmatpush1.msra.mxu0 0.0
        %1481 = vmatprep.subr.mxu0 0.0
        %1482 = vmatpush1.msra.mxu0 0.0
        %1483 = vmatprep.subr.mxu0 0.0
        %1484 = vmatpush1.msra.mxu0 0.0
        %1485 = vmatprep.subr.mxu0 0.0
        %1486 = vmatpush1.msra.mxu0 0.0
        %1487 = vmatprep.mubr.f32.mxu0 0.0
        %1488 = vmatmul.mubr.f32.gmra.mrb[0].mxu0 %v1335
        %v1489 = vpop.f32.mrb[0].mxu0
        %v1490 = vadd.f32 0.0, %v1489
        %v1491 = vpop.f32.mrb[0].mxu0
        %1492 = vmatprep.mubr.f32.mxu0 0.0
        %1493 = vmatmul.mubr.f32.gmra.mrb[0].mxu0 %v1338
        %v1494 = vpop.f32.mrb[0].mxu0
        %v1495 = vadd.f32 0.0, %v1494
        %v1496 = vpop.f32.mrb[0].mxu0
        %1497 = vdwg.mxu0
        %v1498 = vmul.f32 %v1490, %v631
        %v1499 = vmul.f32 %v1495, %v632
        %v1500 = vsel %vm637, %v1498, 0.0
        %1501 = vadd.xlane.f32.xlu0 %v1500
        %v1502 = vpop.xlane.xlu0 %1501
        %v1503 = vsel %vm637, %v1499, 0.0
        %1504 = vadd.xlane.f32.xlu0 %v1503
        %v1505 = vpop.xlane.xlu0 %1504
        %v1506 = vmul.f32 %v1502, %v614
        %v1507 = vmul.f32 %v1505, %v619
        %v1508 = vmul.f32 %v1506, %v1323
        %v1509 = vmul.f32 %v1507, %v1325
        %v1510 = vmul.f32 %v1508, 0.01
        %v1511 = vmul.f32 %v1509, 0.01
        %v1512 = vmax.f32 %v1508, %v1510
        %v1513 = vmax.f32 %v1509, %v1511
        %1516 = vrot.lane.b32.xlu0 %v1512, 32
        %v1517 = vpop.permute.xlu0 %1516
        %1518 = vrot.lane.b32.xlu0 %v1513, 32
        %v1519 = vpop.permute.xlu0 %1518
        %v1522 = vadd.f32 %v1421, %v1517
        %v1523 = vadd.f32 %v1422, %v1519
        %v1524 = vmax.f32 %v1522, 0.0
        %v1525 = vmax.f32 %v1523, 0.0
        %v1526 = vsel %vm412, %v1524, 0.0
        %1527 = vadd.xlane.f32.xlu0 %v1526
        %v1528 = vpop.xlane.xlu0 %1527
        %v1529 = vsel %vm412, %v1525, 0.0
        %1530 = vadd.xlane.f32.xlu0 %v1529
        %v1531 = vpop.xlane.xlu0 %1530
        %v1532 = vmul.f32 %v1528, %v1063
        %v1533 = vmul.f32 %v1531, %v1063
        %v1534 = vsub.f32 %v1524, %v1532
        %v1535 = vsub.f32 %v1525, %v1533
        %v1536 = vmul.f32 %v1534, %v1534
        %v1537 = vmul.f32 %v1535, %v1535
        %v1538 = vsel %vm412, %v1536, 0.0
        %1539 = vadd.xlane.f32.xlu0 %v1538
        %v1540 = vpop.xlane.xlu0 %1539
        %v1541 = vsel %vm412, %v1537, 0.0
        %1542 = vadd.xlane.f32.xlu0 %v1541
        %v1543 = vpop.xlane.xlu0 %1542
        %v1544 = vmul.f32 %v1540, %v1063
        %v1545 = vmul.f32 %v1543, %v1063
        %v1546 = vadd.f32 %v1544, 1e-05
        %v1547 = vadd.f32 %v1545, 1e-05
        %v1548 = vrsqrt.pop %v1546
        %v1549 = vrsqrt.pop %v1547
        %v1550 = vmul.f32 %v1534, %v1548
        %v1551 = vmul.f32 %v1535, %v1549
        %v1552 = vmul.f32 %v1550, %v1089
        %v1553 = vmul.f32 %v1551, %v1089
        %v1554 = vadd.f32 %v1552, %v1098
        %v1555 = vadd.f32 %v1553, %v1098
        %1558 = vrot.lane.b32.xlu0 %v1554, 32
        %v1559 = vpop.permute.xlu0 %1558
        %1560 = vrot.lane.b32.xlu0 %v1555, 32
        %v1561 = vpop.permute.xlu0 %1560
        %v1564 = vsel %vm412, %v1100, %v1559
        %v1565 = vsel %vm412, %v1101, %v1561
        %vm1566 = vcmask 523264
        %1567 = vst.msk [vmem:[%s394] sm:$0xff] %vm1566, %v1564
        %1568 = vst.msk [vmem:[%s394 + $0x8] sm:$0xff] %vm1566, %v1565
        %s1569 = sand.u32 %s215, 1
        %s1570 = scalar_lea.sflag [#allocation4], %s1569
        %s1571 = sand.u32 %s215, 1
        %s1572 = smul.addr %s1571, 16
        %s1573 = scalar_lea.vmem [#allocation10], %s1572
        // Predicated region
        $region69: #{tpu_custom_call.1} parent=51 // pred_check
          %p1574 = pneg %p225
        $region70: #{tpu_custom_call.1} parent=51 // pred_check_branch
          %1576 = sbr.rel (%p1574) target = $region72
        $region71: #{tpu_custom_call.1} parent=51 // pred_region
          %s1578 = ssub.s32 256, 256
          %1579 = vsyncadd %s1570, %s1578
          %s1580 = smul.addr %s29, 2
          %s1581 = smul.addr %s1580, 128
          %s1582 = scalar_lea.hbm %s8, %s1581
          %s1583 = sshll.u32 %s1573, 4
          %s1584 = int_to_ptr.vmem [resolvable:$true] %s1583
          %1589 = dma.vmem_to_hbm [thread:$0]  %s1584, 256, %s1582, %s1570, 128, 128, 8
        $region72: #{tpu_custom_call.1} parent=51 // pred_fallthru
          _
      $region52: #{tpu_custom_call.1} parent=5 // pred_fallthru
        _
      %p1590 = scmp.le.s32.totalorder 2, %s24
      // Predicated region
      $region73: #{tpu_custom_call.1} parent=5 // pred_check
        %p1591 = pneg %p1590
      $region74: #{tpu_custom_call.1} parent=5 // pred_check_branch
        %1593 = sbr.rel (%p1591) target = $region76
      $region75: #{tpu_custom_call.1} parent=5 // pred_region
        %s1594 = ssub.s32 %s24, 2
        // Predicated region
        $region77: #{tpu_custom_call.1} parent=75 // pred_check
          %p1595 = pneg %p231
        $region78: #{tpu_custom_call.1} parent=75 // pred_check_branch
          %1597 = sbr.rel (%p1595) target = $region80
        $region79: #{tpu_custom_call.1} parent=75 // pred_region
          %s1598 = sand.u32 %s216, 1
          %s1599 = scalar_lea.sflag [#allocation4], %s1598
          %s1600 = sand.u32 %s216, 1
          %s1601 = smul.addr %s1600, 16
          %s1602 = scalar_lea.vmem [#allocation10], %s1601
          %1603 = dma.done %s1599, 256
        $region80: #{tpu_custom_call.1} parent=75 // pred_fallthru
          _
      $region76: #{tpu_custom_call.1} parent=5 // pred_fallthru
        _
    $region6: #{tpu_custom_call.1} parent=1 // loop_footer
      %s28 = sadd.s32 1, %s24
    $region7: #{tpu_custom_call.1} parent=1 // loop_footer_branch
      %23 = sbr.rel target = $region3
    $region8: #{tpu_custom_call.1} parent=1 // loop_exit
      _
    %1604 = vsyncpa [#allocation3], 1
    %s1605 = scalar_lea.sflag [#allocation3], 1
    %1606 = vsyncpa %s1605, 1
    %1607 = vsyncpa [#allocation6], 1
    %s1608 = scalar_lea.sflag [#allocation6], 1
    %1609 = vsyncpa %s1608, 1
    %1610 = vsyncpa [#allocation9], 1
    %1611 = vsyncpa [#allocation4], 1
    %s1612 = scalar_lea.sflag [#allocation4], 1
    %1613 = vsyncpa %s1612, 1

</llo_original>
